<compile_context>
chip_gen: v6e
topology: v6e:2x2x1
jax: 0.10.0
libtpu: 0.0.40
codegen_flags: <defaults>
</compile_context>

<pallas_src>
import functools
import math

import jax
import jax.numpy as jnp
from jax.experimental import pallas as pl
from jax.experimental.pallas import tpu as pltpu


def _layernorm(x, g, b, eps):
    mu = jnp.mean(x, axis=-1, keepdims=True)
    xc = x - mu
    var = jnp.mean(xc * xc, axis=-1, keepdims=True)
    return xc * jax.lax.rsqrt(var + eps) * g + b


def cross_attention_kernel(
    tgt_ref, src_ref,
    wv_ref, wo_ref, w1_ref, b1_ref, w2_ref, rows_ref,
    out_ref,
    *, block_b, seq_len, d_model, neg_slope, eps):
    m_rows = block_b * seq_len

    # Packed (7, C) small vectors; static slices are free.
    rows = rows_ref[...]
    bv, bo, b2 = rows[0:1], rows[1:2], rows[2:3]
    g1, be1, g2, be2 = rows[3:4], rows[4:5], rows[5:6], rows[6:7]

    # -------- MultiheadAttention(query=tgt, key=src, value=src) -----------
    # kv sequence length is 1 -> softmax over the single key is exactly 1.0,
    # so the attention output is just the value projection broadcast over the
    # L query positions; the Q/K projections are mathematically dead.
    s = src_ref[...].reshape(block_b, d_model)                               # (BLK, C)
    v = jnp.dot(s, wv_ref[...], preferred_element_type=jnp.float32) + bv     # (BLK, C)
    fusion = jnp.dot(v, wo_ref[...], preferred_element_type=jnp.float32) + bo

    # -------- residual + norm1 --------------------------------------------
    x3 = tgt_ref[...] + fusion[:, None, :]                                   # (BLK, L, C)
    x = _layernorm(x3.reshape(m_rows, d_model), g1, be1, eps)                # (M, C)

    # -------- feed-forward: linear1 -> LeakyReLU -> linear2 ----------------
    h = jnp.dot(x, w1_ref[...], preferred_element_type=jnp.float32) + b1_ref[...]  # (M, F)
    h = jnp.where(h >= 0, h, neg_slope * h)
    y = jnp.dot(h, w2_ref[...], preferred_element_type=jnp.float32) + b2            # (M, C)

    # -------- residual + norm2 --------------------------------------------
    x = _layernorm(x + y, g2, be2, eps)
    out_ref[...] = x.reshape(block_b, seq_len, d_model)


def _pick_block_b(batch, seq_len, max_rows=2048):
    """Largest batch-block that divides B, keeps >= 2 grid steps when possible
    (so both TensorCores get work) and caps the per-step activation slab."""
    divs = [d for d in range(1, batch + 1) if batch % d == 0]
    cands = [d for d in divs if batch // d >= 2] or divs
    cands = [d for d in cands if d * seq_len <= max_rows] or [min(cands)]
    return max(cands)


def init_params(key, d_model, nhead, dim_ff):
    ks = jax.random.split(key, 12)
    def rnd(k, shape, scale=0.05):
        return scale * jax.random.normal(k, shape, jnp.float32)
    in_proj_w = rnd(ks[0], (3 * d_model, d_model))   # nn.MultiheadAttention.in_proj_weight
    in_proj_b = rnd(ks[1], (3 * d_model,))
    wq, wk, wv = jnp.split(in_proj_w, 3, axis=0)
    bq, bk, bv = jnp.split(in_proj_b, 3, axis=0)
    return dict(
        wq=wq, bq=bq, wk=wk, bk=bk, wv=wv, bv=bv,
        wo=rnd(ks[2], (d_model, d_model)), bo=rnd(ks[3], (d_model,)),
        w1=rnd(ks[4], (dim_ff, d_model)),  b1=rnd(ks[5], (dim_ff,)),
        w2=rnd(ks[6], (d_model, dim_ff)),  b2=rnd(ks[7], (d_model,)),
        g1=1.0 + rnd(ks[8], (d_model,)),   be1=rnd(ks[9], (d_model,)),
        g2=1.0 + rnd(ks[10], (d_model,)),  be2=rnd(ks[11], (d_model,)),
    )


def cross_attention_pallas(tgt, src, p, nhead):
    del nhead  # head split is a no-op when the kv sequence length is 1
    B, C, h, w = tgt.shape
    L = h * w
    F = p["w1"].shape[0]

    block_b = _pick_block_b(B, L)
    grid = B // block_b

    # (B, L, C) token-major layout; cheap at these sizes (layout plumbing only).
    x = tgt.reshape(B, C, L).transpose(0, 2, 1).astype(jnp.float32)   # (B, L, C)
    s = src.astype(jnp.float32)                                       # (B, 1, C)

    row = lambda a: a.reshape(1, -1).astype(jnp.float32)
    # Pack all C-length vectors into a single operand: one DMA instead of 7.
    rows = jnp.concatenate(
        [row(p["bv"]), row(p["bo"]), row(p["b2"]),
         row(p["g1"]), row(p["be1"]), row(p["g2"]), row(p["be2"])], axis=0)  # (7, C)

    weights = [
        p["wv"].T.astype(jnp.float32),   # (C, C)
        p["wo"].T.astype(jnp.float32),   # (C, C)
        p["w1"].T.astype(jnp.float32),   # (C, F)
        row(p["b1"]),                    # (1, F)
        p["w2"].T.astype(jnp.float32),   # (F, C)
        rows,                            # (7, C)
    ]

    def full2d(a):
        # Constant block index -> fetched once, not re-DMA'd per grid step.
        return pl.BlockSpec(a.shape, lambda b: (0, 0))

    out = pl.pallas_call(
        functools.partial(cross_attention_kernel,
                          block_b=block_b, seq_len=L, d_model=C,
                          neg_slope=0.01, eps=1e-5),
        out_shape=jax.ShapeDtypeStruct((B, L, C), jnp.float32),
        grid=(grid,),
        in_specs=[pl.BlockSpec((block_b, L, C), lambda b: (b, 0, 0)),
                  pl.BlockSpec((block_b, 1, C), lambda b: (b, 0, 0))]
                 + [full2d(a) for a in weights],
        out_specs=pl.BlockSpec((block_b, L, C), lambda b: (b, 0, 0)),
        compiler_params=pltpu.CompilerParams(
            dimension_semantics=("parallel",)),
    )(x, s, *weights)

    return out.transpose(0, 2, 1).reshape(B, C, h, w)


def cross_attention_reference(tgt, src, p, nhead):
    """Pure-JAX reference mirroring the PyTorch forward (dropout p=0),
    including the full (mathematically-dead) Q/K/softmax path."""
    B, C, h, w = tgt.shape
    L = h * w
    hd = C // nhead
    x = tgt.reshape(B, C, L).transpose(0, 2, 1)            # (B, L, C)
    s = src                                                 # (B, 1, C)
    q = x @ p["wq"].T + p["bq"]
    k = s @ p["wk"].T + p["bk"]
    v = s @ p["wv"].T + p["bv"]
    qh = q.reshape(B, L, nhead, hd)
    kh = k.reshape(B, 1, nhead, hd)
    vh = v.reshape(B, 1, nhead, hd)
    scores = jnp.einsum("blhd,bkhd->blhk", qh, kh) / math.sqrt(hd)
    wts = jax.nn.softmax(scores, axis=-1)
    attn = jnp.einsum("blhk,bkhd->blhd", wts, vh).reshape(B, L, C)
    fusion = attn @ p["wo"].T + p["bo"]

    def ln(z, g, b):
        mu = jnp.mean(z, axis=-1, keepdims=True)
        var = jnp.mean((z - mu) ** 2, axis=-1, keepdims=True)
        return (z - mu) / jnp.sqrt(var + 1e-5) * g + b

    x = ln(x + fusion, p["g1"], p["be1"])
    ff = x @ p["w1"].T + p["b1"]
    ff = jnp.where(ff >= 0, ff, 0.01 * ff)
    ff = ff @ p["w2"].T + p["b2"]
    x = ln(x + ff, p["g2"], p["be2"])
    return x.transpose(0, 2, 1).reshape(B, C, h, w)


if __name__ == "__main__":
    B, d_model, nhead, dim_ff = 4, 32, 4, 64
    h = w = 8

    key = jax.random.PRNGKey(0)
    k_tgt, k_src, k_par = jax.random.split(key, 3)
    tgt = jax.random.normal(k_tgt, (B, d_model, h, w), jnp.float32)
    src = jax.random.normal(k_src, (B, 1, d_model), jnp.float32)
    params = init_params(k_par, d_model, nhead, dim_ff)

    out = jax.block_until_ready(cross_attention_pallas(tgt, src, params, nhead))
    ref = cross_attention_reference(tgt, src, params, nhead)

    err = float(jnp.max(jnp.abs(out - ref)))
    assert out.shape == (B, d_model, h, w)
    assert err < 5e-3, f"mismatch vs reference: {err}"
    print("KERNEL_OK")
</pallas_src>

<mosaic_0001>
module attributes {stable_mosaic.version = 11 : i64} {
  func.func @cross_attention_kernel(%arg0: i32, %arg1: memref<2x64x32xf32, #tpu.memory_space<vmem>>, %arg2: memref<2x1x32xf32, #tpu.memory_space<vmem>>, %arg3: memref<32x32xf32, #tpu.memory_space<vmem>>, %arg4: memref<32x32xf32, #tpu.memory_space<vmem>>, %arg5: memref<32x64xf32, #tpu.memory_space<vmem>>, %arg6: memref<1x64xf32, #tpu.memory_space<vmem>>, %arg7: memref<64x32xf32, #tpu.memory_space<vmem>>, %arg8: memref<7x32xf32, #tpu.memory_space<vmem>>, %arg9: memref<2x64x32xf32, #tpu.memory_space<vmem>>) attributes {dimension_semantics = [#tpu.dimension_semantics<parallel>], iteration_bounds = array<i64: 2>, scalar_prefetch = 0 : i64, scratch_operands = 0 : i64, tpu.core_type = #tpu.core_type<tc>, window_params = [{transform_indices = @transform_0, window_bounds = array<i64: 2, 64, 32>}, {transform_indices = @transform_1, window_bounds = array<i64: 2, 1, 32>}, {pipeline_mode = #tpu.pipeline_mode<synchronous>, transform_indices = @transform_2, window_bounds = array<i64: 32, 32>}, {pipeline_mode = #tpu.pipeline_mode<synchronous>, transform_indices = @transform_3, window_bounds = array<i64: 32, 32>}, {pipeline_mode = #tpu.pipeline_mode<synchronous>, transform_indices = @transform_4, window_bounds = array<i64: 32, 64>}, {pipeline_mode = #tpu.pipeline_mode<synchronous>, transform_indices = @transform_5, window_bounds = array<i64: 1, 64>}, {pipeline_mode = #tpu.pipeline_mode<synchronous>, transform_indices = @transform_6, window_bounds = array<i64: 64, 32>}, {pipeline_mode = #tpu.pipeline_mode<synchronous>, transform_indices = @transform_7, window_bounds = array<i64: 7, 32>}, {transform_indices = @transform_8, window_bounds = array<i64: 2, 64, 32>}]} {
    %c0 = arith.constant 0 : index
    %c0_0 = arith.constant 0 : index
    %0 = vector.load %arg8[%c0, %c0_0] : memref<7x32xf32, #tpu.memory_space<vmem>>, vector<7x32xf32>
    %1 = vector.extract_strided_slice %0 {offsets = [0, 0], sizes = [1, 32], strides = [1, 1]} : vector<7x32xf32> to vector<1x32xf32>
    %2 = vector.extract_strided_slice %0 {offsets = [1, 0], sizes = [1, 32], strides = [1, 1]} : vector<7x32xf32> to vector<1x32xf32>
    %3 = vector.extract_strided_slice %0 {offsets = [2, 0], sizes = [1, 32], strides = [1, 1]} : vector<7x32xf32> to vector<1x32xf32>
    %4 = vector.extract_strided_slice %0 {offsets = [3, 0], sizes = [1, 32], strides = [1, 1]} : vector<7x32xf32> to vector<1x32xf32>
    %5 = vector.extract_strided_slice %0 {offsets = [4, 0], sizes = [1, 32], strides = [1, 1]} : vector<7x32xf32> to vector<1x32xf32>
    %6 = vector.extract_strided_slice %0 {offsets = [5, 0], sizes = [1, 32], strides = [1, 1]} : vector<7x32xf32> to vector<1x32xf32>
    %7 = vector.extract_strided_slice %0 {offsets = [6, 0], sizes = [1, 32], strides = [1, 1]} : vector<7x32xf32> to vector<1x32xf32>
    %c0_1 = arith.constant 0 : index
    %c0_2 = arith.constant 0 : index
    %c0_3 = arith.constant 0 : index
    %8 = vector.load %arg2[%c0_1, %c0_2, %c0_3] : memref<2x1x32xf32, #tpu.memory_space<vmem>>, vector<2x1x32xf32>
    %9 = vector.shape_cast %8 : vector<2x1x32xf32> to vector<2x32xf32>
    %c0_4 = arith.constant 0 : index
    %c0_5 = arith.constant 0 : index
    %10 = vector.load %arg3[%c0_4, %c0_5] : memref<32x32xf32, #tpu.memory_space<vmem>>, vector<32x32xf32>
    %cst = arith.constant dense<0.000000e+00> : vector<2x32xf32>
    %11 = tpu.matmul %9, %10, %cst {dimension_numbers = #tpu.dot_dimension_numbers<[1], [0], [0], [1], [0, 0, 1, 1], [], []>} : vector<2x32xf32>, vector<32x32xf32>, vector<2x32xf32> -> vector<2x32xf32>
    %12 = vector.broadcast %1 : vector<1x32xf32> to vector<2x32xf32>
    %13 = arith.addf %11, %12 : vector<2x32xf32>
    %c0_6 = arith.constant 0 : index
    %c0_7 = arith.constant 0 : index
    %14 = vector.load %arg4[%c0_6, %c0_7] : memref<32x32xf32, #tpu.memory_space<vmem>>, vector<32x32xf32>
    %cst_8 = arith.constant dense<0.000000e+00> : vector<2x32xf32>
    %15 = tpu.matmul %13, %14, %cst_8 {dimension_numbers = #tpu.dot_dimension_numbers<[1], [0], [0], [1], [0, 0, 1, 1], [], []>} : vector<2x32xf32>, vector<32x32xf32>, vector<2x32xf32> -> vector<2x32xf32>
    %16 = vector.broadcast %2 : vector<1x32xf32> to vector<2x32xf32>
    %17 = arith.addf %15, %16 : vector<2x32xf32>
    %c0_9 = arith.constant 0 : index
    %c0_10 = arith.constant 0 : index
    %c0_11 = arith.constant 0 : index
    %18 = vector.load %arg1[%c0_9, %c0_10, %c0_11] : memref<2x64x32xf32, #tpu.memory_space<vmem>>, vector<2x64x32xf32>
    %19 = vector.shape_cast %17 : vector<2x32xf32> to vector<2x1x32xf32>
    %20 = vector.broadcast %19 : vector<2x1x32xf32> to vector<2x64x32xf32>
    %21 = arith.addf %18, %20 : vector<2x64x32xf32>
    %22 = vector.shape_cast %21 : vector<2x64x32xf32> to vector<128x32xf32>
    %cst_12 = arith.constant dense<0.000000e+00> : vector<128xf32>
    %23 = vector.multi_reduction <add>, %22, %cst_12 [1] : vector<128x32xf32> to vector<128xf32>
    %24 = vector.shape_cast %23 : vector<128xf32> to vector<128x1xf32>
    %cst_13 = arith.constant 3.200000e+01 : f32
    %25 = vector.broadcast %cst_13 : f32 to vector<128x1xf32>
    %26 = arith.divf %24, %25 : vector<128x1xf32>
    %27 = vector.broadcast %26 : vector<128x1xf32> to vector<128x32xf32>
    %28 = arith.subf %22, %27 : vector<128x32xf32>
    %29 = arith.mulf %28, %28 : vector<128x32xf32>
    %cst_14 = arith.constant dense<0.000000e+00> : vector<128xf32>
    %30 = vector.multi_reduction <add>, %29, %cst_14 [1] : vector<128x32xf32> to vector<128xf32>
    %31 = vector.shape_cast %30 : vector<128xf32> to vector<128x1xf32>
    %cst_15 = arith.constant 3.200000e+01 : f32
    %32 = vector.broadcast %cst_15 : f32 to vector<128x1xf32>
    %33 = arith.divf %31, %32 : vector<128x1xf32>
    %cst_16 = arith.constant 9.99999974E-6 : f32
    %34 = vector.broadcast %cst_16 : f32 to vector<128x1xf32>
    %35 = arith.addf %33, %34 : vector<128x1xf32>
    %36 = math.rsqrt %35 : vector<128x1xf32>
    %37 = vector.broadcast %36 : vector<128x1xf32> to vector<128x32xf32>
    %38 = arith.mulf %28, %37 : vector<128x32xf32>
    %39 = vector.broadcast %4 : vector<1x32xf32> to vector<128x32xf32>
    %40 = arith.mulf %38, %39 : vector<128x32xf32>
    %41 = vector.broadcast %5 : vector<1x32xf32> to vector<128x32xf32>
    %42 = arith.addf %40, %41 : vector<128x32xf32>
    %c0_17 = arith.constant 0 : index
    %c0_18 = arith.constant 0 : index
    %43 = vector.load %arg5[%c0_17, %c0_18] : memref<32x64xf32, #tpu.memory_space<vmem>>, vector<32x64xf32>
    %cst_19 = arith.constant dense<0.000000e+00> : vector<128x64xf32>
    %44 = tpu.matmul %42, %43, %cst_19 {dimension_numbers = #tpu.dot_dimension_numbers<[1], [0], [0], [1], [0, 0, 1, 1], [], []>} : vector<128x32xf32>, vector<32x64xf32>, vector<128x64xf32> -> vector<128x64xf32>
    %c0_20 = arith.constant 0 : index
    %c0_21 = arith.constant 0 : index
    %45 = vector.load %arg6[%c0_20, %c0_21] : memref<1x64xf32, #tpu.memory_space<vmem>>, vector<1x64xf32>
    %46 = vector.broadcast %45 : vector<1x64xf32> to vector<128x64xf32>
    %47 = arith.addf %44, %46 : vector<128x64xf32>
    %cst_22 = arith.constant 0.000000e+00 : f32
    %48 = vector.broadcast %cst_22 : f32 to vector<128x64xf32>
    %49 = arith.cmpf oge, %47, %48 : vector<128x64xf32>
    %cst_23 = arith.constant 0.00999999977 : f32
    %50 = vector.broadcast %cst_23 : f32 to vector<128x64xf32>
    %51 = arith.mulf %50, %47 : vector<128x64xf32>
    %52 = arith.select %49, %47, %51 : vector<128x64xi1>, vector<128x64xf32>
    %c0_24 = arith.constant 0 : index
    %c0_25 = arith.constant 0 : index
    %53 = vector.load %arg7[%c0_24, %c0_25] : memref<64x32xf32, #tpu.memory_space<vmem>>, vector<64x32xf32>
    %cst_26 = arith.constant dense<0.000000e+00> : vector<128x32xf32>
    %54 = tpu.matmul %52, %53, %cst_26 {dimension_numbers = #tpu.dot_dimension_numbers<[1], [0], [0], [1], [0, 0, 1, 1], [], []>} : vector<128x64xf32>, vector<64x32xf32>, vector<128x32xf32> -> vector<128x32xf32>
    %55 = vector.broadcast %3 : vector<1x32xf32> to vector<128x32xf32>
    %56 = arith.addf %54, %55 : vector<128x32xf32>
    %57 = arith.addf %42, %56 : vector<128x32xf32>
    %cst_27 = arith.constant dense<0.000000e+00> : vector<128xf32>
    %58 = vector.multi_reduction <add>, %57, %cst_27 [1] : vector<128x32xf32> to vector<128xf32>
    %59 = vector.shape_cast %58 : vector<128xf32> to vector<128x1xf32>
    %cst_28 = arith.constant 3.200000e+01 : f32
    %60 = vector.broadcast %cst_28 : f32 to vector<128x1xf32>
    %61 = arith.divf %59, %60 : vector<128x1xf32>
    %62 = vector.broadcast %61 : vector<128x1xf32> to vector<128x32xf32>
    %63 = arith.subf %57, %62 : vector<128x32xf32>
    %64 = arith.mulf %63, %63 : vector<128x32xf32>
    %cst_29 = arith.constant dense<0.000000e+00> : vector<128xf32>
    %65 = vector.multi_reduction <add>, %64, %cst_29 [1] : vector<128x32xf32> to vector<128xf32>
    %66 = vector.shape_cast %65 : vector<128xf32> to vector<128x1xf32>
    %cst_30 = arith.constant 3.200000e+01 : f32
    %67 = vector.broadcast %cst_30 : f32 to vector<128x1xf32>
    %68 = arith.divf %66, %67 : vector<128x1xf32>
    %cst_31 = arith.constant 9.99999974E-6 : f32
    %69 = vector.broadcast %cst_31 : f32 to vector<128x1xf32>
    %70 = arith.addf %68, %69 : vector<128x1xf32>
    %71 = math.rsqrt %70 : vector<128x1xf32>
    %72 = vector.broadcast %71 : vector<128x1xf32> to vector<128x32xf32>
    %73 = arith.mulf %63, %72 : vector<128x32xf32>
    %74 = vector.broadcast %6 : vector<1x32xf32> to vector<128x32xf32>
    %75 = arith.mulf %73, %74 : vector<128x32xf32>
    %76 = vector.broadcast %7 : vector<1x32xf32> to vector<128x32xf32>
    %77 = arith.addf %75, %76 : vector<128x32xf32>
    %78 = vector.shape_cast %77 : vector<128x32xf32> to vector<2x64x32xf32>
    %c0_32 = arith.constant 0 : index
    %c0_33 = arith.constant 0 : index
    %c0_34 = arith.constant 0 : index
    %79 = vector.load %arg9[%c0_32, %c0_33, %c0_34] : memref<2x64x32xf32, #tpu.memory_space<vmem>>, vector<2x64x32xf32>
    tpu.vector_store %arg9[%c0_32, %c0_33, %c0_34], %78 {strides = array<i32>} : memref<2x64x32xf32, #tpu.memory_space<vmem>>, vector<2x64x32xf32>,
    return
  }
  func.func @transform_0(%arg0: i32) -> (i32, i32, i32) {
    %c0_i32 = arith.constant 0 : i32
    %c0_i32_0 = arith.constant 0 : i32
    %c0_i32_1 = arith.constant 0 : i32
    return %arg0, %c0_i32, %c0_i32_0 : i32, i32, i32
  }
  func.func @transform_1(%arg0: i32) -> (i32, i32, i32) {
    %c0_i32 = arith.constant 0 : i32
    %c0_i32_0 = arith.constant 0 : i32
    %c0_i32_1 = arith.constant 0 : i32
    return %arg0, %c0_i32, %c0_i32_0 : i32, i32, i32
  }
  func.func @transform_2(%arg0: i32) -> (i32, i32) {
    %c0_i32 = arith.constant 0 : i32
    %c0_i32_0 = arith.constant 0 : i32
    %c0_i32_1 = arith.constant 0 : i32
    return %c0_i32, %c0_i32_0 : i32, i32
  }
  func.func @transform_3(%arg0: i32) -> (i32, i32) {
    %c0_i32 = arith.constant 0 : i32
    %c0_i32_0 = arith.constant 0 : i32
    %c0_i32_1 = arith.constant 0 : i32
    return %c0_i32, %c0_i32_0 : i32, i32
  }
  func.func @transform_4(%arg0: i32) -> (i32, i32) {
    %c0_i32 = arith.constant 0 : i32
    %c0_i32_0 = arith.constant 0 : i32
    %c0_i32_1 = arith.constant 0 : i32
    return %c0_i32, %c0_i32_0 : i32, i32
  }
  func.func @transform_5(%arg0: i32) -> (i32, i32) {
    %c0_i32 = arith.constant 0 : i32
    %c0_i32_0 = arith.constant 0 : i32
    %c0_i32_1 = arith.constant 0 : i32
    return %c0_i32, %c0_i32_0 : i32, i32
  }
  func.func @transform_6(%arg0: i32) -> (i32, i32) {
    %c0_i32 = arith.constant 0 : i32
    %c0_i32_0 = arith.constant 0 : i32
    %c0_i32_1 = arith.constant 0 : i32
    return %c0_i32, %c0_i32_0 : i32, i32
  }
  func.func @transform_7(%arg0: i32) -> (i32, i32) {
    %c0_i32 = arith.constant 0 : i32
    %c0_i32_0 = arith.constant 0 : i32
    %c0_i32_1 = arith.constant 0 : i32
    return %c0_i32, %c0_i32_0 : i32, i32
  }
  func.func @transform_8(%arg0: i32) -> (i32, i32, i32) {
    %c0_i32 = arith.constant 0 : i32
    %c0_i32_0 = arith.constant 0 : i32
    %c0_i32_1 = arith.constant 0 : i32
    return %arg0, %c0_i32, %c0_i32_0 : i32, i32, i32
  }
}

</mosaic_0001>

<llo_original>
// kernel: tpu_custom_call.1
$region0: #{tpu_custom_call.1}
  #allocation0 [shape = 'u32[]', space=smem, size = 0x4, offset = 0x4, fixed_abs, tag = 'smem constant byte address 0x4 - core index']
  #allocation1 [shape = 'u32[144,128]{1,0:T(1,128)}', space=vmem, size = 0x12000, scoped, tag = 'internal scratch']
  %s0 = inlined_call_operand.vmem [shape: f32[4,64,32], index: 0, kind: input, shape index: {}]
  %s1 = inlined_call_operand.vmem [shape: f32[4,1,32], index: 1, kind: input, shape index: {}]
  %s2 = inlined_call_operand.vmem [shape: f32[32,32], index: 2, kind: input, shape index: {}]
  %s3 = inlined_call_operand.vmem [shape: f32[32,32], index: 3, kind: input, shape index: {}]
  %s4 = inlined_call_operand.vmem [shape: f32[32,64], index: 4, kind: input, shape index: {}]
  %s5 = inlined_call_operand.vmem [shape: f32[1,64], index: 5, kind: input, shape index: {}]
  %s6 = inlined_call_operand.vmem [shape: f32[64,32], index: 6, kind: input, shape index: {}]
  %s7 = inlined_call_operand.vmem [shape: f32[7,32], index: 7, kind: input, shape index: {}]
  %s8 = inlined_call_operand.vmem [shape: f32[4,64,32], index: 8, kind: output, shape index: {}]
  %s9 = sld [smem:[#allocation0]]
  $region65: #{tpu_custom_call.1} parent=0
    _
  %s11 = ssub.s32 1, %s9
  %s12 = scalar_select 0, %s11, %s9
  loop: start=0, step=1, limit=4
  $region2: #{tpu_custom_call.1} parent=0 // loop_pre_header
    _
  $region3: #{tpu_custom_call.1} parent=0 // loop_header
    %s14 = sphi 0, %s18
    %p15 = scmp.ge.s32.totalorder %s14, 4
    %s24 = sphi 0, %s26
    %s27 = sphi 0, %s24
    %s28 = sphi 0, %s27
    %s44 = sphi 0, %s28
    %s50 = sphi 0, %s52
    %s53 = sphi 0, %s50
    %s54 = sphi 0, %s53
    %s70 = sphi 0, %s54
    %s74 = sphi 0, %s74
    %s76 = sphi 0, %s74
    %s77 = sphi 0, %s76
    %s91 = sphi 0, %s77
    %s95 = sphi 0, %s95
    %s97 = sphi 0, %s95
    %s98 = sphi 0, %s97
    %s112 = sphi 0, %s98
    %s116 = sphi 0, %s116
    %s118 = sphi 0, %s116
    %s119 = sphi 0, %s118
    %s133 = sphi 0, %s119
    %s137 = sphi 0, %s137
    %s139 = sphi 0, %s137
    %s140 = sphi 0, %s139
    %s154 = sphi 0, %s140
    %s158 = sphi 0, %s158
    %s160 = sphi 0, %s158
    %s161 = sphi 0, %s160
    %s175 = sphi 0, %s161
    %s179 = sphi 0, %s179
    %s181 = sphi 0, %s179
    %s182 = sphi 0, %s181
    %s196 = sphi 0, %s182
    %s202 = sphi 0, %s204
    %s205 = sphi 0, %s202
    %s206 = sphi 0, %s205
    %s222 = sphi 0, %s206
  $region4: #{tpu_custom_call.1} parent=0 // loop_header_branch
    %17 = sbr.rel (%p15) target = $region8
  $region5: #{tpu_custom_call.1} parent=0 // loop_body
    %s19 = ssub.s32 %s14, 1
    %s20 = ssub.s32 %s14, 2
    %s21 = sadd.s32 %s14, 1
    %s22 = ssub.s32 %s14, %s21
    %p23 = scmp.eq.s32.totalorder %s22, 0
    %s25 = sadd.s32 %s24, 1
    %s26 = scalar_select %p23, %s24, %s25
    %p29 = pneg %p23
    %p30 = scmp.eq.s32.totalorder %s14, 1
    %p31 = por %p29, %p30
    %p32 = scmp.ne.s32.totalorder %s24, %s27
    %p33 = scmp.eq.s32.totalorder %s14, 0
    %p34 = por %p32, %p33
    %p35 = scmp.ne.s32.totalorder %s24, %s27
    %p36 = scmp.eq.s32.totalorder %s19, 1
    %p37 = por %p35, %p36
    %p38 = scmp.ne.s32.totalorder %s27, %s28
    %p39 = scmp.eq.s32.totalorder %s19, 0
    %p40 = por %p38, %p39
    %p41 = scmp.ne.s32.totalorder %s27, %s28
    %p42 = scmp.eq.s32.totalorder %s20, 1
    %p43 = por %p41, %p42
    %p45 = scmp.ne.s32.totalorder %s28, %s44
    %p46 = scmp.eq.s32.totalorder %s20, 0
    %p47 = por %p45, %p46
    %s48 = ssub.s32 %s14, %s21
    %p49 = scmp.eq.s32.totalorder %s48, 0
    %s51 = sadd.s32 %s50, 1
    %s52 = scalar_select %p49, %s50, %s51
    %p55 = pneg %p49
    %p56 = scmp.eq.s32.totalorder %s14, 1
    %p57 = por %p55, %p56
    %p58 = scmp.ne.s32.totalorder %s50, %s53
    %p59 = scmp.eq.s32.totalorder %s14, 0
    %p60 = por %p58, %p59
    %p61 = scmp.ne.s32.totalorder %s50, %s53
    %p62 = scmp.eq.s32.totalorder %s19, 1
    %p63 = por %p61, %p62
    %p64 = scmp.ne.s32.totalorder %s53, %s54
    %p65 = scmp.eq.s32.totalorder %s19, 0
    %p66 = por %p64, %p65
    %p67 = scmp.ne.s32.totalorder %s53, %s54
    %p68 = scmp.eq.s32.totalorder %s20, 1
    %p69 = por %p67, %p68
    %p71 = scmp.ne.s32.totalorder %s54, %s70
    %p72 = scmp.eq.s32.totalorder %s20, 0
    %p73 = por %p71, %p72
    %s75 = sadd.s32 %s74, 1
    %p78 = scmp.eq.s32.totalorder %s14, 1
    %p79 = scmp.ne.s32.totalorder %s74, %s76
    %p80 = scmp.eq.s32.totalorder %s14, 0
    %p81 = por %p79, %p80
    %p82 = scmp.ne.s32.totalorder %s74, %s76
    %p83 = scmp.eq.s32.totalorder %s19, 1
    %p84 = por %p82, %p83
    %p85 = scmp.ne.s32.totalorder %s76, %s77
    %p86 = scmp.eq.s32.totalorder %s19, 0
    %p87 = por %p85, %p86
    %p88 = scmp.ne.s32.totalorder %s76, %s77
    %p89 = scmp.eq.s32.totalorder %s20, 1
    %p90 = por %p88, %p89
    %p92 = scmp.ne.s32.totalorder %s77, %s91
    %p93 = scmp.eq.s32.totalorder %s20, 0
    %p94 = por %p92, %p93
    %s96 = sadd.s32 %s95, 1
    %p99 = scmp.eq.s32.totalorder %s14, 1
    %p100 = scmp.ne.s32.totalorder %s95, %s97
    %p101 = scmp.eq.s32.totalorder %s14, 0
    %p102 = por %p100, %p101
    %p103 = scmp.ne.s32.totalorder %s95, %s97
    %p104 = scmp.eq.s32.totalorder %s19, 1
    %p105 = por %p103, %p104
    %p106 = scmp.ne.s32.totalorder %s97, %s98
    %p107 = scmp.eq.s32.totalorder %s19, 0
    %p108 = por %p106, %p107
    %p109 = scmp.ne.s32.totalorder %s97, %s98
    %p110 = scmp.eq.s32.totalorder %s20, 1
    %p111 = por %p109, %p110
    %p113 = scmp.ne.s32.totalorder %s98, %s112
    %p114 = scmp.eq.s32.totalorder %s20, 0
    %p115 = por %p113, %p114
    %s117 = sadd.s32 %s116, 1
    %p120 = scmp.eq.s32.totalorder %s14, 1
    %p121 = scmp.ne.s32.totalorder %s116, %s118
    %p122 = scmp.eq.s32.totalorder %s14, 0
    %p123 = por %p121, %p122
    %p124 = scmp.ne.s32.totalorder %s116, %s118
    %p125 = scmp.eq.s32.totalorder %s19, 1
    %p126 = por %p124, %p125
    %p127 = scmp.ne.s32.totalorder %s118, %s119
    %p128 = scmp.eq.s32.totalorder %s19, 0
    %p129 = por %p127, %p128
    %p130 = scmp.ne.s32.totalorder %s118, %s119
    %p131 = scmp.eq.s32.totalorder %s20, 1
    %p132 = por %p130, %p131
    %p134 = scmp.ne.s32.totalorder %s119, %s133
    %p135 = scmp.eq.s32.totalorder %s20, 0
    %p136 = por %p134, %p135
    %s138 = sadd.s32 %s137, 1
    %p141 = scmp.eq.s32.totalorder %s14, 1
    %p142 = scmp.ne.s32.totalorder %s137, %s139
    %p143 = scmp.eq.s32.totalorder %s14, 0
    %p144 = por %p142, %p143
    %p145 = scmp.ne.s32.totalorder %s137, %s139
    %p146 = scmp.eq.s32.totalorder %s19, 1
    %p147 = por %p145, %p146
    %p148 = scmp.ne.s32.totalorder %s139, %s140
    %p149 = scmp.eq.s32.totalorder %s19, 0
    %p150 = por %p148, %p149
    %p151 = scmp.ne.s32.totalorder %s139, %s140
    %p152 = scmp.eq.s32.totalorder %s20, 1
    %p153 = por %p151, %p152
    %p155 = scmp.ne.s32.totalorder %s140, %s154
    %p156 = scmp.eq.s32.totalorder %s20, 0
    %p157 = por %p155, %p156
    %s159 = sadd.s32 %s158, 1
    %p162 = scmp.eq.s32.totalorder %s14, 1
    %p163 = scmp.ne.s32.totalorder %s158, %s160
    %p164 = scmp.eq.s32.totalorder %s14, 0
    %p165 = por %p163, %p164
    %p166 = scmp.ne.s32.totalorder %s158, %s160
    %p167 = scmp.eq.s32.totalorder %s19, 1
    %p168 = por %p166, %p167
    %p169 = scmp.ne.s32.totalorder %s160, %s161
    %p170 = scmp.eq.s32.totalorder %s19, 0
    %p171 = por %p169, %p170
    %p172 = scmp.ne.s32.totalorder %s160, %s161
    %p173 = scmp.eq.s32.totalorder %s20, 1
    %p174 = por %p172, %p173
    %p176 = scmp.ne.s32.totalorder %s161, %s175
    %p177 = scmp.eq.s32.totalorder %s20, 0
    %p178 = por %p176, %p177
    %s180 = sadd.s32 %s179, 1
    %p183 = scmp.eq.s32.totalorder %s14, 1
    %p184 = scmp.ne.s32.totalorder %s179, %s181
    %p185 = scmp.eq.s32.totalorder %s14, 0
    %p186 = por %p184, %p185
    %p187 = scmp.ne.s32.totalorder %s179, %s181
    %p188 = scmp.eq.s32.totalorder %s19, 1
    %p189 = por %p187, %p188
    %p190 = scmp.ne.s32.totalorder %s181, %s182
    %p191 = scmp.eq.s32.totalorder %s19, 0
    %p192 = por %p190, %p191
    %p193 = scmp.ne.s32.totalorder %s181, %s182
    %p194 = scmp.eq.s32.totalorder %s20, 1
    %p195 = por %p193, %p194
    %p197 = scmp.ne.s32.totalorder %s182, %s196
    %p198 = scmp.eq.s32.totalorder %s20, 0
    %p199 = por %p197, %p198
    %s200 = ssub.s32 %s14, %s21
    %p201 = scmp.eq.s32.totalorder %s200, 0
    %s203 = sadd.s32 %s202, 1
    %s204 = scalar_select %p201, %s202, %s203
    %p207 = pneg %p201
    %p208 = scmp.eq.s32.totalorder %s14, 1
    %p209 = por %p207, %p208
    %p210 = scmp.ne.s32.totalorder %s202, %s205
    %p211 = scmp.eq.s32.totalorder %s14, 0
    %p212 = por %p210, %p211
    %p213 = scmp.ne.s32.totalorder %s202, %s205
    %p214 = scmp.eq.s32.totalorder %s19, 1
    %p215 = por %p213, %p214
    %p216 = scmp.ne.s32.totalorder %s205, %s206
    %p217 = scmp.eq.s32.totalorder %s19, 0
    %p218 = por %p216, %p217
    %p219 = scmp.ne.s32.totalorder %s205, %s206
    %p220 = scmp.eq.s32.totalorder %s20, 1
    %p221 = por %p219, %p220
    %p223 = scmp.ne.s32.totalorder %s206, %s222
    %p224 = scmp.eq.s32.totalorder %s20, 0
    %p225 = por %p223, %p224
    %p226 = scmp.le.s32.totalorder 1, %s14
    %p227 = scmp.lt.s32.totalorder %s14, 3
    %p228 = pnand %p226, %p227
    %p229 = pneg %p228
    // Predicated region
    $region9: #{tpu_custom_call.1} parent=5 // pred_check
      _
    $region10: #{tpu_custom_call.1} parent=5 // pred_check_branch
      %231 = sbr.rel (%p228) target = $region12
    $region11: #{tpu_custom_call.1} parent=5 // pred_region
      %s232 = ssub.s32 %s14, 1
      // Predicated region
      $region13: #{tpu_custom_call.1} parent=11 // pred_check
        %p233 = pneg %p87
      $region14: #{tpu_custom_call.1} parent=11 // pred_check_branch
        %235 = sbr.rel (%p233) target = $region16
      $region15: #{tpu_custom_call.1} parent=11 // pred_region
        _
      $region16: #{tpu_custom_call.1} parent=11 // pred_fallthru
        _
      // Predicated region
      $region17: #{tpu_custom_call.1} parent=11 // pred_check
        %p236 = pneg %p108
      $region18: #{tpu_custom_call.1} parent=11 // pred_check_branch
        %238 = sbr.rel (%p236) target = $region20
      $region19: #{tpu_custom_call.1} parent=11 // pred_region
        _
      $region20: #{tpu_custom_call.1} parent=11 // pred_fallthru
        _
      // Predicated region
      $region21: #{tpu_custom_call.1} parent=11 // pred_check
        %p239 = pneg %p129
      $region22: #{tpu_custom_call.1} parent=11 // pred_check_branch
        %241 = sbr.rel (%p239) target = $region24
      $region23: #{tpu_custom_call.1} parent=11 // pred_region
        _
      $region24: #{tpu_custom_call.1} parent=11 // pred_fallthru
        _
      // Predicated region
      $region25: #{tpu_custom_call.1} parent=11 // pred_check
        %p242 = pneg %p150
      $region26: #{tpu_custom_call.1} parent=11 // pred_check_branch
        %244 = sbr.rel (%p242) target = $region28
      $region27: #{tpu_custom_call.1} parent=11 // pred_region
        _
      $region28: #{tpu_custom_call.1} parent=11 // pred_fallthru
        _
      // Predicated region
      $region29: #{tpu_custom_call.1} parent=11 // pred_check
        %p245 = pneg %p171
      $region30: #{tpu_custom_call.1} parent=11 // pred_check_branch
        %247 = sbr.rel (%p245) target = $region32
      $region31: #{tpu_custom_call.1} parent=11 // pred_region
        _
      $region32: #{tpu_custom_call.1} parent=11 // pred_fallthru
        _
      // Predicated region
      $region33: #{tpu_custom_call.1} parent=11 // pred_check
        %p248 = pneg %p192
      $region34: #{tpu_custom_call.1} parent=11 // pred_check_branch
        %250 = sbr.rel (%p248) target = $region36
      $region35: #{tpu_custom_call.1} parent=11 // pred_region
        _
      $region36: #{tpu_custom_call.1} parent=11 // pred_fallthru
        _
    $region12: #{tpu_custom_call.1} parent=5 // pred_fallthru
      _
    %p251 = scmp.lt.s32.totalorder %s14, 2
    // Predicated region
    $region37: #{tpu_custom_call.1} parent=5 // pred_check
      %p252 = pneg %p251
    $region38: #{tpu_custom_call.1} parent=5 // pred_check_branch
      %254 = sbr.rel (%p252) target = $region40
    $region39: #{tpu_custom_call.1} parent=5 // pred_region
      // Predicated region
      $region41: #{tpu_custom_call.1} parent=39 // pred_check
        %p255 = pneg %p34
      $region42: #{tpu_custom_call.1} parent=39 // pred_check_branch
        %257 = sbr.rel (%p255) target = $region44
      $region43: #{tpu_custom_call.1} parent=39 // pred_region
        %s258 = smul.u32 2, %s14
        %p259 = scmp.lt.s32.totalorder %s258, 3
        %s260 = scalar_select %p259, %s258, 3
        %s261 = smul.addr %s260, 8
        %s262 = smul.addr %s261, 8
        %s263 = scalar_lea.vmem %s0, %s262
        %s264 = smul.u32 2, %s14
      $region44: #{tpu_custom_call.1} parent=39 // pred_fallthru
        _
      // Predicated region
      $region45: #{tpu_custom_call.1} parent=39 // pred_check
        %p265 = pneg %p60
      $region46: #{tpu_custom_call.1} parent=39 // pred_check_branch
        %267 = sbr.rel (%p265) target = $region48
      $region47: #{tpu_custom_call.1} parent=39 // pred_region
        %s268 = smul.u32 2, %s14
        %p269 = scmp.lt.s32.totalorder %s268, 3
        %s270 = scalar_select %p269, %s268, 3
        %s271 = scalar_lea.vmem %s1, %s270
        %s272 = smul.u32 2, %s14
      $region48: #{tpu_custom_call.1} parent=39 // pred_fallthru
        _
    $region40: #{tpu_custom_call.1} parent=5 // pred_fallthru
      _
    %p273 = scmp.le.s32.totalorder 1, %s14
    %p274 = scmp.lt.s32.totalorder %s14, 3
    %p275 = pnand %p273, %p274
    %p276 = pneg %p275
    // Predicated region
    $region49: #{tpu_custom_call.1} parent=5 // pred_check
      _
    $region50: #{tpu_custom_call.1} parent=5 // pred_check_branch
      %278 = sbr.rel (%p275) target = $region52
    $region51: #{tpu_custom_call.1} parent=5 // pred_region
      %s279 = ssub.s32 %s14, 1
      %s280 = smul.u32 2, %s19
      %p281 = scmp.lt.s32.totalorder %s280, 3
      %s282 = scalar_select %p281, %s280, 3
      %s283 = smul.addr %s282, 8
      %s284 = smul.addr %s283, 8
      %s285 = scalar_lea.vmem %s0, %s284
      %p286 = pneg %p40
      %p287 = pneg %p37
      %s288 = smul.u32 2, %s19
      %p289 = scmp.lt.s32.totalorder %s288, 3
      %s290 = scalar_select %p289, %s288, 3
      %s291 = scalar_lea.vmem %s1, %s290
      %p292 = pneg %p66
      %p293 = pneg %p63
      %p294 = pneg %p87
      %p295 = pneg %p84
      %p296 = pneg %p108
      %p297 = pneg %p105
      %p298 = pneg %p129
      %p299 = pneg %p126
      %p300 = pneg %p150
      %p301 = pneg %p147
      %p302 = pneg %p171
      %p303 = pneg %p168
      %p304 = pneg %p192
      %p305 = pneg %p189
      %p306 = pneg %p218
      %p307 = pneg %p215
      %s308 = smul.u32 2, %s19
      %p309 = scmp.lt.s32.totalorder %s308, 3
      %s310 = scalar_select %p309, %s308, 3
      %s311 = smul.addr %s310, 8
      %s312 = smul.addr %s311, 8
      %s313 = scalar_lea.vmem %s8, %s312
      %s314 = smul.u32 2, %s19
      %p315 = scmp.lt.s32.totalorder %s314, 3
      %s316 = scalar_select %p315, %s314, 3
      %s317 = smul.addr %s316, 8
      %s318 = smul.addr %s317, 8
      %s319 = scalar_lea.vmem %s0, %s318
      %s320 = smul.u32 2, %s19
      %s321 = smul.u32 2, %s19
      %p322 = scmp.lt.s32.totalorder %s321, 3
      %s323 = scalar_select %p322, %s321, 3
      %s324 = scalar_lea.vmem %s1, %s323
      %s325 = smul.u32 2, %s19
      %s326 = smul.u32 2, %s19
      %p327 = scmp.lt.s32.totalorder %s326, 3
      %s328 = scalar_select %p327, %s326, 3
      %s329 = smul.addr %s328, 8
      %s330 = smul.addr %s329, 8
      %s331 = scalar_lea.vmem %s8, %s330
      %s332 = smul.u32 2, %s19
      %v333 = vld [vmem:[%s7] sm:$0x7f]
      %v334 = vld [vmem:[%s324] sm:$0x1]
      %v335 = vld [vmem:[%s324 + $0x1] sm:$0x1]
      %v336 = vld [vmem:[%s2] sm:$0xff]
      %v337 = vld [vmem:[%s2 + $0x8] sm:$0xff]
      %v338 = vld [vmem:[%s2 + $0x10] sm:$0xff]
      %v339 = vld [vmem:[%s2 + $0x18] sm:$0xff]
      %v340 = vlaneseq
      %v341 = vshrl.u32 %v340, 7
      %v342 = vsub.s32 0, %v341
      %v343 = vrot.slane %v333, %v342
      %v346 = vcombine.low %v334, %v335
      %v348 = vunpack.c.l.s4 1966171168
      %v349 = vunpack.c.0.s8 %v348
      %v350 = vlaneseq
      %v351 = vshrl.u32 %v350, 7
      %v352 = vsub.s32 %v349, %v351
      %v353 = vrot.slane %v346, %v352
      %v355 = vunpack.c.l.s4 1966171168
      %v356 = vunpack.c.0.s8 %v355
      %v357 = vlaneseq
      %v358 = vshrl.u32 %v357, 7
      %v359 = vsub.s32 %v356, %v358
      %v360 = vrot.slane %v353, %v359
      %vm361 = vcmask 261120
      %v362 = vsel %vm361, %v360, 0
      %364 = vmatprep.subr.mxu0 0.0
      %365 = vmatpush1.msra.mxu0 0.0
      %366 = vmatprep.subr.mxu0 0.0
      %367 = vmatpush1.msra.mxu0 0.0
      %368 = vmatprep.subr.mxu0 0.0
      %369 = vmatpush1.msra.mxu0 0.0
      %370 = vmatprep.subr.mxu0 0.0
      %371 = vmatpush1.msra.mxu0 0.0
      %372 = vmatprep.subr.mxu0 0.0
      %373 = vmatpush1.msra.mxu0 0.0
      %374 = vmatprep.subr.mxu0 0.0
      %375 = vmatpush1.msra.mxu0 0.0
      %376 = vmatprep.subr.mxu0 0.0
      %377 = vmatpush1.msra.mxu0 0.0
      %378 = vmatprep.subr.mxu0 0.0
      %379 = vmatpush1.msra.mxu0 0.0
      %380 = vmatprep.subr.mxu0 0.0
      %381 = vmatpush1.msra.mxu0 0.0
      %382 = vmatprep.subr.mxu0 0.0
      %383 = vmatpush1.msra.mxu0 0.0
      %384 = vmatprep.subr.mxu0 0.0
      %385 = vmatpush1.msra.mxu0 0.0
      %386 = vmatprep.subr.mxu0 0.0
      %387 = vmatpush1.msra.mxu0 0.0
      %388 = vmatprep.subr.mxu0 0.0
      %389 = vmatpush1.msra.mxu0 %v339
      %390 = vmatprep.subr.mxu0 0.0
      %391 = vmatpush1.msra.mxu0 %v338
      %392 = vmatprep.subr.mxu0 0.0
      %393 = vmatpush1.msra.mxu0 %v337
      %394 = vmatprep.subr.mxu0 0.0
      %395 = vmatpush1.msra.mxu0 %v336
      %396 = vmatprep.subr.mxu0 0.0
      %397 = vmatpush2.msra.mxu0 0.0
      %398 = vmatprep.subr.mxu0 0.0
      %399 = vmatpush2.msra.mxu0 0.0
      %400 = vmatprep.subr.mxu0 0.0
      %401 = vmatpush2.msra.mxu0 0.0
      %402 = vmatprep.subr.mxu0 0.0
      %403 = vmatpush2.msra.mxu0 0.0
      %404 = vmatprep.subr.mxu0 0.0
      %405 = vmatpush2.msra.mxu0 0.0
      %406 = vmatprep.subr.mxu0 0.0
      %407 = vmatpush2.msra.mxu0 0.0
      %408 = vmatprep.subr.mxu0 0.0
      %409 = vmatpush2.msra.mxu0 0.0
      %410 = vmatprep.subr.mxu0 0.0
      %411 = vmatpush2.msra.mxu0 0.0
      %412 = vmatprep.subr.mxu0 0.0
      %413 = vmatpush2.msra.mxu0 0.0
      %414 = vmatprep.subr.mxu0 0.0
      %415 = vmatpush2.msra.mxu0 0.0
      %416 = vmatprep.subr.mxu0 0.0
      %417 = vmatpush2.msra.mxu0 0.0
      %418 = vmatprep.subr.mxu0 0.0
      %419 = vmatpush2.msra.mxu0 0.0
      %420 = vmatprep.subr.mxu0 0.0
      %421 = vmatpush2.msra.mxu0 0.0
      %422 = vmatprep.subr.mxu0 0.0
      %423 = vmatpush2.msra.mxu0 0.0
      %424 = vmatprep.subr.mxu0 0.0
      %425 = vmatpush2.msra.mxu0 0.0
      %426 = vmatprep.subr.mxu0 0.0
      %427 = vmatpush2.msra.mxu0 0.0
      %428 = vmatprep.mubr.f32.mxu0 0.0
      %429 = vmatmul.mubr.f32.gmra.mxu0 %v362
      %v430 = vpop.f32.mrf.mxu0
      %v431 = vadd.f32 %v343, %v430
      %v432 = vpop.f32.mrf.mxu0
      %433 = vdwg.mxu0
      %v434 = vld [vmem:[%s3] sm:$0xff]
      %v435 = vld [vmem:[%s3 + $0x8] sm:$0xff]
      %v436 = vld [vmem:[%s3 + $0x10] sm:$0xff]
      %v437 = vld [vmem:[%s3 + $0x18] sm:$0xff]
      %v438 = vlaneseq
      %v439 = vshrl.u32 %v438, 7
      %v440 = vsub.s32 1, %v439
      %v441 = vrot.slane %v333, %v440
      %v443 = vsel %vm361, %v431, 0
      %445 = vmatprep.subr.mxu0 0.0
      %446 = vmatpush1.msra.mxu0 0.0
      %447 = vmatprep.subr.mxu0 0.0
      %448 = vmatpush1.msra.mxu0 0.0
      %449 = vmatprep.subr.mxu0 0.0
      %450 = vmatpush1.msra.mxu0 0.0
      %451 = vmatprep.subr.mxu0 0.0
      %452 = vmatpush1.msra.mxu0 0.0
      %453 = vmatprep.subr.mxu0 0.0
      %454 = vmatpush1.msra.mxu0 0.0
      %455 = vmatprep.subr.mxu0 0.0
      %456 = vmatpush1.msra.mxu0 0.0
      %457 = vmatprep.subr.mxu0 0.0
      %458 = vmatpush1.msra.mxu0 0.0
      %459 = vmatprep.subr.mxu0 0.0
      %460 = vmatpush1.msra.mxu0 0.0
      %461 = vmatprep.subr.mxu0 0.0
      %462 = vmatpush1.msra.mxu0 0.0
      %463 = vmatprep.subr.mxu0 0.0
      %464 = vmatpush1.msra.mxu0 0.0
      %465 = vmatprep.subr.mxu0 0.0
      %466 = vmatpush1.msra.mxu0 0.0
      %467 = vmatprep.subr.mxu0 0.0
      %468 = vmatpush1.msra.mxu0 0.0
      %469 = vmatprep.subr.mxu0 0.0
      %470 = vmatpush1.msra.mxu0 %v437
      %471 = vmatprep.subr.mxu0 0.0
      %472 = vmatpush1.msra.mxu0 %v436
      %473 = vmatprep.subr.mxu0 0.0
      %474 = vmatpush1.msra.mxu0 %v435
      %475 = vmatprep.subr.mxu0 0.0
      %476 = vmatpush1.msra.mxu0 %v434
      %477 = vmatprep.subr.mxu0 0.0
      %478 = vmatpush2.msra.mxu0 0.0
      %479 = vmatprep.subr.mxu0 0.0
      %480 = vmatpush2.msra.mxu0 0.0
      %481 = vmatprep.subr.mxu0 0.0
      %482 = vmatpush2.msra.mxu0 0.0
      %483 = vmatprep.subr.mxu0 0.0
      %484 = vmatpush2.msra.mxu0 0.0
      %485 = vmatprep.subr.mxu0 0.0
      %486 = vmatpush2.msra.mxu0 0.0
      %487 = vmatprep.subr.mxu0 0.0
      %488 = vmatpush2.msra.mxu0 0.0
      %489 = vmatprep.subr.mxu0 0.0
      %490 = vmatpush2.msra.mxu0 0.0
      %491 = vmatprep.subr.mxu0 0.0
      %492 = vmatpush2.msra.mxu0 0.0
      %493 = vmatprep.subr.mxu0 0.0
      %494 = vmatpush2.msra.mxu0 0.0
      %495 = vmatprep.subr.mxu0 0.0
      %496 = vmatpush2.msra.mxu0 0.0
      %497 = vmatprep.subr.mxu0 0.0
      %498 = vmatpush2.msra.mxu0 0.0
      %499 = vmatprep.subr.mxu0 0.0
      %500 = vmatpush2.msra.mxu0 0.0
      %501 = vmatprep.subr.mxu0 0.0
      %502 = vmatpush2.msra.mxu0 0.0
      %503 = vmatprep.subr.mxu0 0.0
      %504 = vmatpush2.msra.mxu0 0.0
      %505 = vmatprep.subr.mxu0 0.0
      %506 = vmatpush2.msra.mxu0 0.0
      %507 = vmatprep.subr.mxu0 0.0
      %508 = vmatpush2.msra.mxu0 0.0
      %509 = vmatprep.mubr.f32.mxu0 0.0
      %510 = vmatmul.mubr.f32.gmra.mxu0 %v443
      %v511 = vpop.f32.mrf.mxu0
      %v512 = vadd.f32 %v441, %v511
      %v513 = vpop.f32.mrf.mxu0
      %514 = vdwg.mxu0
      %v515 = vld [vmem:[%s319] sm:$0xff]
      %v516 = vld [vmem:[%s319 + $0x8] sm:$0xff]
      %v517 = vld [vmem:[%s319 + $0x10] sm:$0xff]
      %v518 = vld [vmem:[%s319 + $0x18] sm:$0xff]
      %v519 = vld [vmem:[%s319 + $0x20] sm:$0xff]
      %v520 = vld [vmem:[%s319 + $0x28] sm:$0xff]
      %v521 = vld [vmem:[%s319 + $0x30] sm:$0xff]
      %v522 = vld [vmem:[%s319 + $0x38] sm:$0xff]
      %v523 = vld [vmem:[%s319 + $0x40] sm:$0xff]
      %v524 = vld [vmem:[%s319 + $0x48] sm:$0xff]
      %v525 = vld [vmem:[%s319 + $0x50] sm:$0xff]
      %v526 = vld [vmem:[%s319 + $0x58] sm:$0xff]
      %v527 = vld [vmem:[%s319 + $0x60] sm:$0xff]
      %v528 = vld [vmem:[%s319 + $0x68] sm:$0xff]
      %v529 = vld [vmem:[%s319 + $0x70] sm:$0xff]
      %v530 = vld [vmem:[%s319 + $0x78] sm:$0xff]
      %v533 = vunpack.c.l.s4 1966171168
      %v534 = vunpack.c.0.s8 %v533
      %v535 = vlaneseq
      %v536 = vshrl.u32 %v535, 7
      %v537 = vsub.s32 %v534, %v536
      %v538 = vrot.slane %v512, %v537
      %v539 = vcombine.high %v538, %v538
      %v541 = vunpack.c.l.s4 1966171168
      %v542 = vunpack.c.0.s8 %v541
      %v543 = vlaneseq
      %v544 = vshrl.u32 %v543, 7
      %v545 = vsub.s32 %v542, %v544
      %v546 = vrot.slane %v538, %v545
      %v548 = vunpack.c.l.s4 1966171168
      %v549 = vunpack.c.0.s8 %v548
      %v550 = vlaneseq
      %v551 = vshrl.u32 %v550, 7
      %v552 = vsub.s32 %v549, %v551
      %v553 = vrot.slane %v539, %v552
      %v554 = vlaneseq
      %v555 = vshrl.u32 %v554, 7
      %v556 = vsub.s32 0, %v555
      %v557 = vrot.slane %v546, %v556
      %v558 = vlaneseq
      %v559 = vshrl.u32 %v558, 7
      %v560 = vsub.s32 0, %v559
      %v561 = vrot.slane %v553, %v560
      %v564 = vadd.f32 %v515, %v557
      %v565 = vadd.f32 %v516, %v557
      %v566 = vadd.f32 %v517, %v557
      %v567 = vadd.f32 %v518, %v557
      %v568 = vadd.f32 %v519, %v557
      %v569 = vadd.f32 %v520, %v557
      %v570 = vadd.f32 %v521, %v557
      %v571 = vadd.f32 %v522, %v557
      %v572 = vadd.f32 %v523, %v561
      %v573 = vadd.f32 %v524, %v561
      %v574 = vadd.f32 %v525, %v561
      %v575 = vadd.f32 %v526, %v561
      %v576 = vadd.f32 %v527, %v561
      %v577 = vadd.f32 %v528, %v561
      %v578 = vadd.f32 %v529, %v561
      %v579 = vadd.f32 %v530, %v561
      %v580 = vsel %vm361, %v564, 0.0
      %581 = vadd.xlane.f32.xlu0 %v580
      %v582 = vpop.xlane.xlu0 %581
      %v583 = vsel %vm361, %v565, 0.0
      %584 = vadd.xlane.f32.xlu0 %v583
      %v585 = vpop.xlane.xlu0 %584
      %v586 = vsel %vm361, %v566, 0.0
      %587 = vadd.xlane.f32.xlu0 %v586
      %v588 = vpop.xlane.xlu0 %587
      %v589 = vsel %vm361, %v567, 0.0
      %590 = vadd.xlane.f32.xlu0 %v589
      %v591 = vpop.xlane.xlu0 %590
      %v592 = vsel %vm361, %v568, 0.0
      %593 = vadd.xlane.f32.xlu0 %v592
      %v594 = vpop.xlane.xlu0 %593
      %v595 = vsel %vm361, %v569, 0.0
      %596 = vadd.xlane.f32.xlu0 %v595
      %v597 = vpop.xlane.xlu0 %596
      %v598 = vsel %vm361, %v570, 0.0
      %599 = vadd.xlane.f32.xlu0 %v598
      %v600 = vpop.xlane.xlu0 %599
      %v601 = vsel %vm361, %v571, 0.0
      %602 = vadd.xlane.f32.xlu0 %v601
      %v603 = vpop.xlane.xlu0 %602
      %v604 = vsel %vm361, %v572, 0.0
      %605 = vadd.xlane.f32.xlu0 %v604
      %v606 = vpop.xlane.xlu0 %605
      %v607 = vsel %vm361, %v573, 0.0
      %608 = vadd.xlane.f32.xlu0 %v607
      %v609 = vpop.xlane.xlu0 %608
      %v610 = vsel %vm361, %v574, 0.0
      %611 = vadd.xlane.f32.xlu0 %v610
      %v612 = vpop.xlane.xlu0 %611
      %v613 = vsel %vm361, %v575, 0.0
      %614 = vadd.xlane.f32.xlu0 %v613
      %v615 = vpop.xlane.xlu0 %614
      %v616 = vsel %vm361, %v576, 0.0
      %617 = vadd.xlane.f32.xlu0 %v616
      %v618 = vpop.xlane.xlu0 %617
      %v619 = vsel %vm361, %v577, 0.0
      %620 = vadd.xlane.f32.xlu0 %v619
      %v621 = vpop.xlane.xlu0 %620
      %v622 = vsel %vm361, %v578, 0.0
      %623 = vadd.xlane.f32.xlu0 %v622
      %v624 = vpop.xlane.xlu0 %623
      %v625 = vsel %vm361, %v579, 0.0
      %626 = vadd.xlane.f32.xlu0 %v625
      %v627 = vpop.xlane.xlu0 %626
      %v628 = vrcp.pop 32.0
      %v629 = vmul.f32 %v582, %v628
      %v630 = vmul.f32 %v585, %v628
      %v631 = vmul.f32 %v588, %v628
      %v632 = vmul.f32 %v591, %v628
      %v633 = vmul.f32 %v594, %v628
      %v634 = vmul.f32 %v597, %v628
      %v635 = vmul.f32 %v600, %v628
      %v636 = vmul.f32 %v603, %v628
      %v637 = vmul.f32 %v606, %v628
      %v638 = vmul.f32 %v609, %v628
      %v639 = vmul.f32 %v612, %v628
      %v640 = vmul.f32 %v615, %v628
      %v641 = vmul.f32 %v618, %v628
      %v642 = vmul.f32 %v621, %v628
      %v643 = vmul.f32 %v624, %v628
      %v644 = vmul.f32 %v627, %v628
      %v645 = vsub.f32 %v564, %v629
      %v646 = vsub.f32 %v565, %v630
      %v647 = vsub.f32 %v566, %v631
      %v648 = vsub.f32 %v567, %v632
      %v649 = vsub.f32 %v568, %v633
      %v650 = vsub.f32 %v569, %v634
      %v651 = vsub.f32 %v570, %v635
      %v652 = vsub.f32 %v571, %v636
      %v653 = vsub.f32 %v572, %v637
      %v654 = vsub.f32 %v573, %v638
      %v655 = vsub.f32 %v574, %v639
      %v656 = vsub.f32 %v575, %v640
      %v657 = vsub.f32 %v576, %v641
      %v658 = vsub.f32 %v577, %v642
      %v659 = vsub.f32 %v578, %v643
      %v660 = vsub.f32 %v579, %v644
      %v661 = vmul.f32 %v645, %v645
      %v662 = vmul.f32 %v646, %v646
      %v663 = vmul.f32 %v647, %v647
      %v664 = vmul.f32 %v648, %v648
      %v665 = vmul.f32 %v649, %v649
      %v666 = vmul.f32 %v650, %v650
      %v667 = vmul.f32 %v651, %v651
      %v668 = vmul.f32 %v652, %v652
      %v669 = vmul.f32 %v653, %v653
      %v670 = vmul.f32 %v654, %v654
      %v671 = vmul.f32 %v655, %v655
      %v672 = vmul.f32 %v656, %v656
      %v673 = vmul.f32 %v657, %v657
      %v674 = vmul.f32 %v658, %v658
      %v675 = vmul.f32 %v659, %v659
      %v676 = vmul.f32 %v660, %v660
      %v677 = vsel %vm361, %v661, 0.0
      %678 = vadd.xlane.f32.xlu0 %v677
      %v679 = vpop.xlane.xlu0 %678
      %v680 = vsel %vm361, %v662, 0.0
      %681 = vadd.xlane.f32.xlu0 %v680
      %v682 = vpop.xlane.xlu0 %681
      %v683 = vsel %vm361, %v663, 0.0
      %684 = vadd.xlane.f32.xlu0 %v683
      %v685 = vpop.xlane.xlu0 %684
      %v686 = vsel %vm361, %v664, 0.0
      %687 = vadd.xlane.f32.xlu0 %v686
      %v688 = vpop.xlane.xlu0 %687
      %v689 = vsel %vm361, %v665, 0.0
      %690 = vadd.xlane.f32.xlu0 %v689
      %v691 = vpop.xlane.xlu0 %690
      %v692 = vsel %vm361, %v666, 0.0
      %693 = vadd.xlane.f32.xlu0 %v692
      %v694 = vpop.xlane.xlu0 %693
      %v695 = vsel %vm361, %v667, 0.0
      %696 = vadd.xlane.f32.xlu0 %v695
      %v697 = vpop.xlane.xlu0 %696
      %v698 = vsel %vm361, %v668, 0.0
      %699 = vadd.xlane.f32.xlu0 %v698
      %v700 = vpop.xlane.xlu0 %699
      %v701 = vsel %vm361, %v669, 0.0
      %702 = vadd.xlane.f32.xlu0 %v701
      %v703 = vpop.xlane.xlu0 %702
      %v704 = vsel %vm361, %v670, 0.0
      %705 = vadd.xlane.f32.xlu0 %v704
      %v706 = vpop.xlane.xlu0 %705
      %v707 = vsel %vm361, %v671, 0.0
      %708 = vadd.xlane.f32.xlu0 %v707
      %v709 = vpop.xlane.xlu0 %708
      %v710 = vsel %vm361, %v672, 0.0
      %711 = vadd.xlane.f32.xlu0 %v710
      %v712 = vpop.xlane.xlu0 %711
      %v713 = vsel %vm361, %v673, 0.0
      %714 = vadd.xlane.f32.xlu0 %v713
      %v715 = vpop.xlane.xlu0 %714
      %v716 = vsel %vm361, %v674, 0.0
      %717 = vadd.xlane.f32.xlu0 %v716
      %v718 = vpop.xlane.xlu0 %717
      %v719 = vsel %vm361, %v675, 0.0
      %720 = vadd.xlane.f32.xlu0 %v719
      %v721 = vpop.xlane.xlu0 %720
      %v722 = vsel %vm361, %v676, 0.0
      %723 = vadd.xlane.f32.xlu0 %v722
      %v724 = vpop.xlane.xlu0 %723
      %v725 = vmul.f32 %v679, %v628
      %v726 = vmul.f32 %v682, %v628
      %v727 = vmul.f32 %v685, %v628
      %v728 = vmul.f32 %v688, %v628
      %v729 = vmul.f32 %v691, %v628
      %v730 = vmul.f32 %v694, %v628
      %v731 = vmul.f32 %v697, %v628
      %v732 = vmul.f32 %v700, %v628
      %v733 = vmul.f32 %v703, %v628
      %v734 = vmul.f32 %v706, %v628
      %v735 = vmul.f32 %v709, %v628
      %v736 = vmul.f32 %v712, %v628
      %v737 = vmul.f32 %v715, %v628
      %v738 = vmul.f32 %v718, %v628
      %v739 = vmul.f32 %v721, %v628
      %v740 = vmul.f32 %v724, %v628
      %v741 = vadd.f32 %v725, 1e-05
      %v742 = vadd.f32 %v726, 1e-05
      %v743 = vadd.f32 %v727, 1e-05
      %v744 = vadd.f32 %v728, 1e-05
      %v745 = vadd.f32 %v729, 1e-05
      %v746 = vadd.f32 %v730, 1e-05
      %v747 = vadd.f32 %v731, 1e-05
      %v748 = vadd.f32 %v732, 1e-05
      %v749 = vadd.f32 %v733, 1e-05
      %v750 = vadd.f32 %v734, 1e-05
      %v751 = vadd.f32 %v735, 1e-05
      %v752 = vadd.f32 %v736, 1e-05
      %v753 = vadd.f32 %v737, 1e-05
      %v754 = vadd.f32 %v738, 1e-05
      %v755 = vadd.f32 %v739, 1e-05
      %v756 = vadd.f32 %v740, 1e-05
      %v757 = vrsqrt.pop %v741
      %v758 = vrsqrt.pop %v742
      %v759 = vrsqrt.pop %v743
      %v760 = vrsqrt.pop %v744
      %v761 = vrsqrt.pop %v745
      %v762 = vrsqrt.pop %v746
      %v763 = vrsqrt.pop %v747
      %v764 = vrsqrt.pop %v748
      %v765 = vrsqrt.pop %v749
      %v766 = vrsqrt.pop %v750
      %v767 = vrsqrt.pop %v751
      %v768 = vrsqrt.pop %v752
      %v769 = vrsqrt.pop %v753
      %v770 = vrsqrt.pop %v754
      %v771 = vrsqrt.pop %v755
      %v772 = vrsqrt.pop %v756
      %v773 = vmul.f32 %v645, %v757
      %v774 = vmul.f32 %v646, %v758
      %v775 = vmul.f32 %v647, %v759
      %v776 = vmul.f32 %v648, %v760
      %v777 = vmul.f32 %v649, %v761
      %v778 = vmul.f32 %v650, %v762
      %v779 = vmul.f32 %v651, %v763
      %v780 = vmul.f32 %v652, %v764
      %v781 = vmul.f32 %v653, %v765
      %v782 = vmul.f32 %v654, %v766
      %v783 = vmul.f32 %v655, %v767
      %v784 = vmul.f32 %v656, %v768
      %v785 = vmul.f32 %v657, %v769
      %v786 = vmul.f32 %v658, %v770
      %v787 = vmul.f32 %v659, %v771
      %v788 = vmul.f32 %v660, %v772
      %v789 = vlaneseq
      %v790 = vshrl.u32 %v789, 7
      %v791 = vsub.s32 3, %v790
      %v792 = vrot.slane %v333, %v791
      %v793 = vmul.f32 %v773, %v792
      %v794 = vmul.f32 %v774, %v792
      %v795 = vmul.f32 %v775, %v792
      %v796 = vmul.f32 %v776, %v792
      %v797 = vmul.f32 %v777, %v792
      %v798 = vmul.f32 %v778, %v792
      %v799 = vmul.f32 %v779, %v792
      %v800 = vmul.f32 %v780, %v792
      %v801 = vmul.f32 %v781, %v792
      %v802 = vmul.f32 %v782, %v792
      %v803 = vmul.f32 %v783, %v792
      %v804 = vmul.f32 %v784, %v792
      %v805 = vmul.f32 %v785, %v792
      %v806 = vmul.f32 %v786, %v792
      %v807 = vmul.f32 %v787, %v792
      %v808 = vmul.f32 %v788, %v792
      %v809 = vlaneseq
      %v810 = vshrl.u32 %v809, 7
      %v811 = vsub.s32 4, %v810
      %v812 = vrot.slane %v333, %v811
      %v813 = vadd.f32 %v793, %v812
      %v814 = vadd.f32 %v794, %v812
      %v815 = vadd.f32 %v795, %v812
      %v816 = vadd.f32 %v796, %v812
      %v817 = vadd.f32 %v797, %v812
      %v818 = vadd.f32 %v798, %v812
      %v819 = vadd.f32 %v799, %v812
      %v820 = vadd.f32 %v800, %v812
      %v821 = vadd.f32 %v801, %v812
      %v822 = vadd.f32 %v802, %v812
      %v823 = vadd.f32 %v803, %v812
      %v824 = vadd.f32 %v804, %v812
      %v825 = vadd.f32 %v805, %v812
      %v826 = vadd.f32 %v806, %v812
      %v827 = vadd.f32 %v807, %v812
      %v828 = vadd.f32 %v808, %v812
      %v829 = vld [vmem:[%s4] sm:$0xff]
      %v830 = vld [vmem:[%s4 + $0x8] sm:$0xff]
      %v831 = vld [vmem:[%s4 + $0x10] sm:$0xff]
      %v832 = vld [vmem:[%s4 + $0x18] sm:$0xff]
      %v833 = vld [vmem:[%s5] sm:$0x1]
      %v835 = vlaneseq
      %v836 = vshrl.u32 %v835, 7
      %v837 = vsub.s32 0, %v836
      %v838 = vrot.slane %v833, %v837
      %v841 = vsel %vm361, %v813, 0
      %v844 = vsel %vm361, %v814, 0
      %v847 = vsel %vm361, %v815, 0
      %v850 = vsel %vm361, %v816, 0
      %v853 = vsel %vm361, %v817, 0
      %v856 = vsel %vm361, %v818, 0
      %v859 = vsel %vm361, %v819, 0
      %v862 = vsel %vm361, %v820, 0
      %v865 = vsel %vm361, %v821, 0
      %v868 = vsel %vm361, %v822, 0
      %v871 = vsel %vm361, %v823, 0
      %v874 = vsel %vm361, %v824, 0
      %v877 = vsel %vm361, %v825, 0
      %v880 = vsel %vm361, %v826, 0
      %v883 = vsel %vm361, %v827, 0
      %v886 = vsel %vm361, %v828, 0
      %888 = vmatprep.subr.mxu0 0.0
      %889 = vmatpush1.msra.mxu0 0.0
      %890 = vmatprep.subr.mxu0 0.0
      %891 = vmatpush1.msra.mxu0 0.0
      %892 = vmatprep.subr.mxu0 0.0
      %893 = vmatpush1.msra.mxu0 0.0
      %894 = vmatprep.subr.mxu0 0.0
      %895 = vmatpush1.msra.mxu0 0.0
      %896 = vmatprep.subr.mxu0 0.0
      %897 = vmatpush1.msra.mxu0 0.0
      %898 = vmatprep.subr.mxu0 0.0
      %899 = vmatpush1.msra.mxu0 0.0
      %900 = vmatprep.subr.mxu0 0.0
      %901 = vmatpush1.msra.mxu0 0.0
      %902 = vmatprep.subr.mxu0 0.0
      %903 = vmatpush1.msra.mxu0 0.0
      %904 = vmatprep.subr.mxu0 0.0
      %905 = vmatpush1.msra.mxu0 0.0
      %906 = vmatprep.subr.mxu0 0.0
      %907 = vmatpush1.msra.mxu0 0.0
      %908 = vmatprep.subr.mxu0 0.0
      %909 = vmatpush1.msra.mxu0 0.0
      %910 = vmatprep.subr.mxu0 0.0
      %911 = vmatpush1.msra.mxu0 0.0
      %912 = vmatprep.subr.mxu0 0.0
      %913 = vmatpush1.msra.mxu0 %v832
      %914 = vmatprep.subr.mxu0 0.0
      %915 = vmatpush1.msra.mxu0 %v831
      %916 = vmatprep.subr.mxu0 0.0
      %917 = vmatpush1.msra.mxu0 %v830
      %918 = vmatprep.subr.mxu0 0.0
      %919 = vmatpush1.msra.mxu0 %v829
      %920 = vmatprep.subr.mxu0 0.0
      %921 = vmatpush2.msra.mxu0 0.0
      %922 = vmatprep.subr.mxu0 0.0
      %923 = vmatpush2.msra.mxu0 0.0
      %924 = vmatprep.subr.mxu0 0.0
      %925 = vmatpush2.msra.mxu0 0.0
      %926 = vmatprep.subr.mxu0 0.0
      %927 = vmatpush2.msra.mxu0 0.0
      %928 = vmatprep.subr.mxu0 0.0
      %929 = vmatpush2.msra.mxu0 0.0
      %930 = vmatprep.subr.mxu0 0.0
      %931 = vmatpush2.msra.mxu0 0.0
      %932 = vmatprep.subr.mxu0 0.0
      %933 = vmatpush2.msra.mxu0 0.0
      %934 = vmatprep.subr.mxu0 0.0
      %935 = vmatpush2.msra.mxu0 0.0
      %936 = vmatprep.subr.mxu0 0.0
      %937 = vmatpush2.msra.mxu0 0.0
      %938 = vmatprep.subr.mxu0 0.0
      %939 = vmatpush2.msra.mxu0 0.0
      %940 = vmatprep.subr.mxu0 0.0
      %941 = vmatpush2.msra.mxu0 0.0
      %942 = vmatprep.subr.mxu0 0.0
      %943 = vmatpush2.msra.mxu0 0.0
      %944 = vmatprep.subr.mxu0 0.0
      %945 = vmatpush2.msra.mxu0 0.0
      %946 = vmatprep.subr.mxu0 0.0
      %947 = vmatpush2.msra.mxu0 0.0
      %948 = vmatprep.subr.mxu0 0.0
      %949 = vmatpush2.msra.mxu0 0.0
      %950 = vmatprep.subr.mxu0 0.0
      %951 = vmatpush2.msra.mxu0 0.0
      %952 = vmatprep.mubr.f32.mxu0 0.0
      %953 = vmatmul.mubr.f32.gmra.mxu0 %v841
      %v954 = vpop.f32.mrf.mxu0
      %v955 = vadd.f32 %v838, %v954
      %v956 = vpop.f32.mrf.mxu0
      %957 = vmatprep.mubr.f32.mxu0 0.0
      %958 = vmatmul.mubr.f32.gmra.mxu0 %v844
      %v959 = vpop.f32.mrf.mxu0
      %v960 = vadd.f32 %v838, %v959
      %v961 = vpop.f32.mrf.mxu0
      %962 = vmatprep.mubr.f32.mxu0 0.0
      %963 = vmatmul.mubr.f32.gmra.mxu0 %v847
      %v964 = vpop.f32.mrf.mxu0
      %v965 = vadd.f32 %v838, %v964
      %v966 = vpop.f32.mrf.mxu0
      %967 = vmatprep.mubr.f32.mxu0 0.0
      %968 = vmatmul.mubr.f32.gmra.mxu0 %v850
      %v969 = vpop.f32.mrf.mxu0
      %v970 = vadd.f32 %v838, %v969
      %v971 = vpop.f32.mrf.mxu0
      %972 = vmatprep.mubr.f32.mxu0 0.0
      %973 = vmatmul.mubr.f32.gmra.mxu0 %v853
      %v974 = vpop.f32.mrf.mxu0
      %v975 = vadd.f32 %v838, %v974
      %v976 = vpop.f32.mrf.mxu0
      %977 = vmatprep.mubr.f32.mxu0 0.0
      %978 = vmatmul.mubr.f32.gmra.mxu0 %v856
      %v979 = vpop.f32.mrf.mxu0
      %v980 = vadd.f32 %v838, %v979
      %v981 = vpop.f32.mrf.mxu0
      %982 = vmatprep.mubr.f32.mxu0 0.0
      %983 = vmatmul.mubr.f32.gmra.mxu0 %v859
      %v984 = vpop.f32.mrf.mxu0
      %v985 = vadd.f32 %v838, %v984
      %v986 = vpop.f32.mrf.mxu0
      %987 = vmatprep.mubr.f32.mxu0 0.0
      %988 = vmatmul.mubr.f32.gmra.mxu0 %v862
      %v989 = vpop.f32.mrf.mxu0
      %v990 = vadd.f32 %v838, %v989
      %v991 = vpop.f32.mrf.mxu0
      %992 = vmatprep.mubr.f32.mxu0 0.0
      %993 = vmatmul.mubr.f32.gmra.mxu0 %v865
      %v994 = vpop.f32.mrf.mxu0
      %v995 = vadd.f32 %v838, %v994
      %v996 = vpop.f32.mrf.mxu0
      %997 = vmatprep.mubr.f32.mxu0 0.0
      %998 = vmatmul.mubr.f32.gmra.mxu0 %v868
      %v999 = vpop.f32.mrf.mxu0
      %v1000 = vadd.f32 %v838, %v999
      %v1001 = vpop.f32.mrf.mxu0
      %1002 = vmatprep.mubr.f32.mxu0 0.0
      %1003 = vmatmul.mubr.f32.gmra.mxu0 %v871
      %v1004 = vpop.f32.mrf.mxu0
      %v1005 = vadd.f32 %v838, %v1004
      %v1006 = vpop.f32.mrf.mxu0
      %1007 = vmatprep.mubr.f32.mxu0 0.0
      %1008 = vmatmul.mubr.f32.gmra.mxu0 %v874
      %v1009 = vpop.f32.mrf.mxu0
      %v1010 = vadd.f32 %v838, %v1009
      %v1011 = vpop.f32.mrf.mxu0
      %1012 = vmatprep.mubr.f32.mxu0 0.0
      %1013 = vmatmul.mubr.f32.gmra.mxu0 %v877
      %v1014 = vpop.f32.mrf.mxu0
      %v1015 = vadd.f32 %v838, %v1014
      %v1016 = vpop.f32.mrf.mxu0
      %1017 = vmatprep.mubr.f32.mxu0 0.0
      %1018 = vmatmul.mubr.f32.gmra.mxu0 %v880
      %v1019 = vpop.f32.mrf.mxu0
      %v1020 = vadd.f32 %v838, %v1019
      %v1021 = vpop.f32.mrf.mxu0
      %1022 = vmatprep.mubr.f32.mxu0 0.0
      %1023 = vmatmul.mubr.f32.gmra.mxu0 %v883
      %v1024 = vpop.f32.mrf.mxu0
      %v1025 = vadd.f32 %v838, %v1024
      %v1026 = vpop.f32.mrf.mxu0
      %1027 = vmatprep.mubr.f32.mxu0 0.0
      %1028 = vmatmul.mubr.f32.gmra.mxu0 %v886
      %v1029 = vpop.f32.mrf.mxu0
      %v1030 = vadd.f32 %v838, %v1029
      %v1031 = vpop.f32.mrf.mxu0
      %1032 = vdwg.mxu0
      %vm1033 = vcmp.ge.f32.partialorder %v955, 0.0
      %vm1034 = vcmp.ge.f32.partialorder %v960, 0.0
      %vm1035 = vcmp.ge.f32.partialorder %v965, 0.0
      %vm1036 = vcmp.ge.f32.partialorder %v970, 0.0
      %vm1037 = vcmp.ge.f32.partialorder %v975, 0.0
      %vm1038 = vcmp.ge.f32.partialorder %v980, 0.0
      %vm1039 = vcmp.ge.f32.partialorder %v985, 0.0
      %vm1040 = vcmp.ge.f32.partialorder %v990, 0.0
      %vm1041 = vcmp.ge.f32.partialorder %v995, 0.0
      %vm1042 = vcmp.ge.f32.partialorder %v1000, 0.0
      %vm1043 = vcmp.ge.f32.partialorder %v1005, 0.0
      %vm1044 = vcmp.ge.f32.partialorder %v1010, 0.0
      %vm1045 = vcmp.ge.f32.partialorder %v1015, 0.0
      %vm1046 = vcmp.ge.f32.partialorder %v1020, 0.0
      %vm1047 = vcmp.ge.f32.partialorder %v1025, 0.0
      %vm1048 = vcmp.ge.f32.partialorder %v1030, 0.0
      %v1049 = vmul.f32 %v955, 0.01
      %v1050 = vmul.f32 %v960, 0.01
      %v1051 = vmul.f32 %v965, 0.01
      %v1052 = vmul.f32 %v970, 0.01
      %v1053 = vmul.f32 %v975, 0.01
      %v1054 = vmul.f32 %v980, 0.01
      %v1055 = vmul.f32 %v985, 0.01
      %v1056 = vmul.f32 %v990, 0.01
      %v1057 = vmul.f32 %v995, 0.01
      %v1058 = vmul.f32 %v1000, 0.01
      %v1059 = vmul.f32 %v1005, 0.01
      %v1060 = vmul.f32 %v1010, 0.01
      %v1061 = vmul.f32 %v1015, 0.01
      %v1062 = vmul.f32 %v1020, 0.01
      %v1063 = vmul.f32 %v1025, 0.01
      %v1064 = vmul.f32 %v1030, 0.01
      %v1065 = vsel %vm1033, %v955, %v1049
      %v1066 = vsel %vm1034, %v960, %v1050
      %v1067 = vsel %vm1035, %v965, %v1051
      %v1068 = vsel %vm1036, %v970, %v1052
      %v1069 = vsel %vm1037, %v975, %v1053
      %v1070 = vsel %vm1038, %v980, %v1054
      %v1071 = vsel %vm1039, %v985, %v1055
      %v1072 = vsel %vm1040, %v990, %v1056
      %v1073 = vsel %vm1041, %v995, %v1057
      %v1074 = vsel %vm1042, %v1000, %v1058
      %v1075 = vsel %vm1043, %v1005, %v1059
      %v1076 = vsel %vm1044, %v1010, %v1060
      %v1077 = vsel %vm1045, %v1015, %v1061
      %v1078 = vsel %vm1046, %v1020, %v1062
      %v1079 = vsel %vm1047, %v1025, %v1063
      %v1080 = vsel %vm1048, %v1030, %v1064
      %v1081 = vld [vmem:[%s6] sm:$0xff]
      %v1082 = vld [vmem:[%s6 + $0x8] sm:$0xff]
      %v1083 = vld [vmem:[%s6 + $0x10] sm:$0xff]
      %v1084 = vld [vmem:[%s6 + $0x18] sm:$0xff]
      %v1085 = vld [vmem:[%s6 + $0x20] sm:$0xff]
      %v1086 = vld [vmem:[%s6 + $0x28] sm:$0xff]
      %v1087 = vld [vmem:[%s6 + $0x30] sm:$0xff]
      %v1088 = vld [vmem:[%s6 + $0x38] sm:$0xff]
      %v1089 = vlaneseq
      %v1090 = vshrl.u32 %v1089, 7
      %v1091 = vsub.s32 2, %v1090
      %v1092 = vrot.slane %v333, %v1091
      %vm1093 = vcmask 523264
      %v1095 = vsel %vm1093, %v1065, 0
      %v1098 = vsel %vm1093, %v1066, 0
      %v1101 = vsel %vm1093, %v1067, 0
      %v1104 = vsel %vm1093, %v1068, 0
      %v1107 = vsel %vm1093, %v1069, 0
      %v1110 = vsel %vm1093, %v1070, 0
      %v1113 = vsel %vm1093, %v1071, 0
      %v1116 = vsel %vm1093, %v1072, 0
      %v1119 = vsel %vm1093, %v1073, 0
      %v1122 = vsel %vm1093, %v1074, 0
      %v1125 = vsel %vm1093, %v1075, 0
      %v1128 = vsel %vm1093, %v1076, 0
      %v1131 = vsel %vm1093, %v1077, 0
      %v1134 = vsel %vm1093, %v1078, 0
      %v1137 = vsel %vm1093, %v1079, 0
      %v1140 = vsel %vm1093, %v1080, 0
      %1142 = vmatprep.subr.mxu0 0.0
      %1143 = vmatpush1.msra.mxu0 0.0
      %1144 = vmatprep.subr.mxu0 0.0
      %1145 = vmatpush1.msra.mxu0 0.0
      %1146 = vmatprep.subr.mxu0 0.0
      %1147 = vmatpush1.msra.mxu0 0.0
      %1148 = vmatprep.subr.mxu0 0.0
      %1149 = vmatpush1.msra.mxu0 0.0
      %1150 = vmatprep.subr.mxu0 0.0
      %1151 = vmatpush1.msra.mxu0 0.0
      %1152 = vmatprep.subr.mxu0 0.0
      %1153 = vmatpush1.msra.mxu0 0.0
      %1154 = vmatprep.subr.mxu0 0.0
      %1155 = vmatpush1.msra.mxu0 0.0
      %1156 = vmatprep.subr.mxu0 0.0
      %1157 = vmatpush1.msra.mxu0 0.0
      %1158 = vmatprep.subr.mxu0 0.0
      %1159 = vmatpush1.msra.mxu0 %v1088
      %1160 = vmatprep.subr.mxu0 0.0
      %1161 = vmatpush1.msra.mxu0 %v1087
      %1162 = vmatprep.subr.mxu0 0.0
      %1163 = vmatpush1.msra.mxu0 %v1086
      %1164 = vmatprep.subr.mxu0 0.0
      %1165 = vmatpush1.msra.mxu0 %v1085
      %1166 = vmatprep.subr.mxu0 0.0
      %1167 = vmatpush1.msra.mxu0 %v1084
      %1168 = vmatprep.subr.mxu0 0.0
      %1169 = vmatpush1.msra.mxu0 %v1083
      %1170 = vmatprep.subr.mxu0 0.0
      %1171 = vmatpush1.msra.mxu0 %v1082
      %1172 = vmatprep.subr.mxu0 0.0
      %1173 = vmatpush1.msra.mxu0 %v1081
      %1174 = vmatprep.subr.mxu0 0.0
      %1175 = vmatpush2.msra.mxu0 0.0
      %1176 = vmatprep.subr.mxu0 0.0
      %1177 = vmatpush2.msra.mxu0 0.0
      %1178 = vmatprep.subr.mxu0 0.0
      %1179 = vmatpush2.msra.mxu0 0.0
      %1180 = vmatprep.subr.mxu0 0.0
      %1181 = vmatpush2.msra.mxu0 0.0
      %1182 = vmatprep.subr.mxu0 0.0
      %1183 = vmatpush2.msra.mxu0 0.0
      %1184 = vmatprep.subr.mxu0 0.0
      %1185 = vmatpush2.msra.mxu0 0.0
      %1186 = vmatprep.subr.mxu0 0.0
      %1187 = vmatpush2.msra.mxu0 0.0
      %1188 = vmatprep.subr.mxu0 0.0
      %1189 = vmatpush2.msra.mxu0 0.0
      %1190 = vmatprep.subr.mxu0 0.0
      %1191 = vmatpush2.msra.mxu0 0.0
      %1192 = vmatprep.subr.mxu0 0.0
      %1193 = vmatpush2.msra.mxu0 0.0
      %1194 = vmatprep.subr.mxu0 0.0
      %1195 = vmatpush2.msra.mxu0 0.0
      %1196 = vmatprep.subr.mxu0 0.0
      %1197 = vmatpush2.msra.mxu0 0.0
      %1198 = vmatprep.subr.mxu0 0.0
      %1199 = vmatpush2.msra.mxu0 0.0
      %1200 = vmatprep.subr.mxu0 0.0
      %1201 = vmatpush2.msra.mxu0 0.0
      %1202 = vmatprep.subr.mxu0 0.0
      %1203 = vmatpush2.msra.mxu0 0.0
      %1204 = vmatprep.subr.mxu0 0.0
      %1205 = vmatpush2.msra.mxu0 0.0
      %1206 = vmatprep.mubr.f32.mxu0 0.0
      %1207 = vmatmul.mubr.f32.gmra.mxu0 %v1095
      %v1208 = vpop.f32.mrf.mxu0
      %v1209 = vadd.f32 %v1092, %v1208
      %v1210 = vpop.f32.mrf.mxu0
      %1211 = vmatprep.mubr.f32.mxu0 0.0
      %1212 = vmatmul.mubr.f32.gmra.mxu0 %v1098
      %v1213 = vpop.f32.mrf.mxu0
      %v1214 = vadd.f32 %v1092, %v1213
      %v1215 = vpop.f32.mrf.mxu0
      %1216 = vmatprep.mubr.f32.mxu0 0.0
      %1217 = vmatmul.mubr.f32.gmra.mxu0 %v1101
      %v1218 = vpop.f32.mrf.mxu0
      %v1219 = vadd.f32 %v1092, %v1218
      %v1220 = vpop.f32.mrf.mxu0
      %1221 = vmatprep.mubr.f32.mxu0 0.0
      %1222 = vmatmul.mubr.f32.gmra.mxu0 %v1104
      %v1223 = vpop.f32.mrf.mxu0
      %v1224 = vadd.f32 %v1092, %v1223
      %v1225 = vpop.f32.mrf.mxu0
      %1226 = vmatprep.mubr.f32.mxu0 0.0
      %1227 = vmatmul.mubr.f32.gmra.mxu0 %v1107
      %v1228 = vpop.f32.mrf.mxu0
      %v1229 = vadd.f32 %v1092, %v1228
      %v1230 = vpop.f32.mrf.mxu0
      %1231 = vmatprep.mubr.f32.mxu0 0.0
      %1232 = vmatmul.mubr.f32.gmra.mxu0 %v1110
      %v1233 = vpop.f32.mrf.mxu0
      %v1234 = vadd.f32 %v1092, %v1233
      %v1235 = vpop.f32.mrf.mxu0
      %1236 = vmatprep.mubr.f32.mxu0 0.0
      %1237 = vmatmul.mubr.f32.gmra.mxu0 %v1113
      %v1238 = vpop.f32.mrf.mxu0
      %v1239 = vadd.f32 %v1092, %v1238
      %v1240 = vpop.f32.mrf.mxu0
      %1241 = vmatprep.mubr.f32.mxu0 0.0
      %1242 = vmatmul.mubr.f32.gmra.mxu0 %v1116
      %v1243 = vpop.f32.mrf.mxu0
      %v1244 = vadd.f32 %v1092, %v1243
      %v1245 = vpop.f32.mrf.mxu0
      %1246 = vmatprep.mubr.f32.mxu0 0.0
      %1247 = vmatmul.mubr.f32.gmra.mxu0 %v1119
      %v1248 = vpop.f32.mrf.mxu0
      %v1249 = vadd.f32 %v1092, %v1248
      %v1250 = vpop.f32.mrf.mxu0
      %1251 = vmatprep.mubr.f32.mxu0 0.0
      %1252 = vmatmul.mubr.f32.gmra.mxu0 %v1122
      %v1253 = vpop.f32.mrf.mxu0
      %v1254 = vadd.f32 %v1092, %v1253
      %v1255 = vpop.f32.mrf.mxu0
      %1256 = vmatprep.mubr.f32.mxu0 0.0
      %1257 = vmatmul.mubr.f32.gmra.mxu0 %v1125
      %v1258 = vpop.f32.mrf.mxu0
      %v1259 = vadd.f32 %v1092, %v1258
      %v1260 = vpop.f32.mrf.mxu0
      %1261 = vmatprep.mubr.f32.mxu0 0.0
      %1262 = vmatmul.mubr.f32.gmra.mxu0 %v1128
      %v1263 = vpop.f32.mrf.mxu0
      %v1264 = vadd.f32 %v1092, %v1263
      %v1265 = vpop.f32.mrf.mxu0
      %1266 = vmatprep.mubr.f32.mxu0 0.0
      %1267 = vmatmul.mubr.f32.gmra.mxu0 %v1131
      %v1268 = vpop.f32.mrf.mxu0
      %v1269 = vadd.f32 %v1092, %v1268
      %v1270 = vpop.f32.mrf.mxu0
      %1271 = vmatprep.mubr.f32.mxu0 0.0
      %1272 = vmatmul.mubr.f32.gmra.mxu0 %v1134
      %v1273 = vpop.f32.mrf.mxu0
      %v1274 = vadd.f32 %v1092, %v1273
      %v1275 = vpop.f32.mrf.mxu0
      %1276 = vmatprep.mubr.f32.mxu0 0.0
      %1277 = vmatmul.mubr.f32.gmra.mxu0 %v1137
      %v1278 = vpop.f32.mrf.mxu0
      %v1279 = vadd.f32 %v1092, %v1278
      %v1280 = vpop.f32.mrf.mxu0
      %1281 = vmatprep.mubr.f32.mxu0 0.0
      %1282 = vmatmul.mubr.f32.gmra.mxu0 %v1140
      %v1283 = vpop.f32.mrf.mxu0
      %v1284 = vadd.f32 %v1092, %v1283
      %v1285 = vpop.f32.mrf.mxu0
      %1286 = vdwg.mxu0
      %v1287 = vadd.f32 %v813, %v1209
      %v1288 = vadd.f32 %v814, %v1214
      %v1289 = vadd.f32 %v815, %v1219
      %v1290 = vadd.f32 %v816, %v1224
      %v1291 = vadd.f32 %v817, %v1229
      %v1292 = vadd.f32 %v818, %v1234
      %v1293 = vadd.f32 %v819, %v1239
      %v1294 = vadd.f32 %v820, %v1244
      %v1295 = vadd.f32 %v821, %v1249
      %v1296 = vadd.f32 %v822, %v1254
      %v1297 = vadd.f32 %v823, %v1259
      %v1298 = vadd.f32 %v824, %v1264
      %v1299 = vadd.f32 %v825, %v1269
      %v1300 = vadd.f32 %v826, %v1274
      %v1301 = vadd.f32 %v827, %v1279
      %v1302 = vadd.f32 %v828, %v1284
      %v1303 = vsel %vm361, %v1287, 0.0
      %1304 = vadd.xlane.f32.xlu0 %v1303
      %v1305 = vpop.xlane.xlu0 %1304
      %v1306 = vsel %vm361, %v1288, 0.0
      %1307 = vadd.xlane.f32.xlu0 %v1306
      %v1308 = vpop.xlane.xlu0 %1307
      %v1309 = vsel %vm361, %v1289, 0.0
      %1310 = vadd.xlane.f32.xlu0 %v1309
      %v1311 = vpop.xlane.xlu0 %1310
      %v1312 = vsel %vm361, %v1290, 0.0
      %1313 = vadd.xlane.f32.xlu0 %v1312
      %v1314 = vpop.xlane.xlu0 %1313
      %v1315 = vsel %vm361, %v1291, 0.0
      %1316 = vadd.xlane.f32.xlu0 %v1315
      %v1317 = vpop.xlane.xlu0 %1316
      %v1318 = vsel %vm361, %v1292, 0.0
      %1319 = vadd.xlane.f32.xlu0 %v1318
      %v1320 = vpop.xlane.xlu0 %1319
      %v1321 = vsel %vm361, %v1293, 0.0
      %1322 = vadd.xlane.f32.xlu0 %v1321
      %v1323 = vpop.xlane.xlu0 %1322
      %v1324 = vsel %vm361, %v1294, 0.0
      %1325 = vadd.xlane.f32.xlu0 %v1324
      %v1326 = vpop.xlane.xlu0 %1325
      %v1327 = vsel %vm361, %v1295, 0.0
      %1328 = vadd.xlane.f32.xlu0 %v1327
      %v1329 = vpop.xlane.xlu0 %1328
      %v1330 = vsel %vm361, %v1296, 0.0
      %1331 = vadd.xlane.f32.xlu0 %v1330
      %v1332 = vpop.xlane.xlu0 %1331
      %v1333 = vsel %vm361, %v1297, 0.0
      %1334 = vadd.xlane.f32.xlu0 %v1333
      %v1335 = vpop.xlane.xlu0 %1334
      %v1336 = vsel %vm361, %v1298, 0.0
      %1337 = vadd.xlane.f32.xlu0 %v1336
      %v1338 = vpop.xlane.xlu0 %1337
      %v1339 = vsel %vm361, %v1299, 0.0
      %1340 = vadd.xlane.f32.xlu0 %v1339
      %v1341 = vpop.xlane.xlu0 %1340
      %v1342 = vsel %vm361, %v1300, 0.0
      %1343 = vadd.xlane.f32.xlu0 %v1342
      %v1344 = vpop.xlane.xlu0 %1343
      %v1345 = vsel %vm361, %v1301, 0.0
      %1346 = vadd.xlane.f32.xlu0 %v1345
      %v1347 = vpop.xlane.xlu0 %1346
      %v1348 = vsel %vm361, %v1302, 0.0
      %1349 = vadd.xlane.f32.xlu0 %v1348
      %v1350 = vpop.xlane.xlu0 %1349
      %v1351 = vmul.f32 %v1305, %v628
      %v1352 = vmul.f32 %v1308, %v628
      %v1353 = vmul.f32 %v1311, %v628
      %v1354 = vmul.f32 %v1314, %v628
      %v1355 = vmul.f32 %v1317, %v628
      %v1356 = vmul.f32 %v1320, %v628
      %v1357 = vmul.f32 %v1323, %v628
      %v1358 = vmul.f32 %v1326, %v628
      %v1359 = vmul.f32 %v1329, %v628
      %v1360 = vmul.f32 %v1332, %v628
      %v1361 = vmul.f32 %v1335, %v628
      %v1362 = vmul.f32 %v1338, %v628
      %v1363 = vmul.f32 %v1341, %v628
      %v1364 = vmul.f32 %v1344, %v628
      %v1365 = vmul.f32 %v1347, %v628
      %v1366 = vmul.f32 %v1350, %v628
      %v1367 = vsub.f32 %v1287, %v1351
      %v1368 = vsub.f32 %v1288, %v1352
      %v1369 = vsub.f32 %v1289, %v1353
      %v1370 = vsub.f32 %v1290, %v1354
      %v1371 = vsub.f32 %v1291, %v1355
      %v1372 = vsub.f32 %v1292, %v1356
      %v1373 = vsub.f32 %v1293, %v1357
      %v1374 = vsub.f32 %v1294, %v1358
      %v1375 = vsub.f32 %v1295, %v1359
      %v1376 = vsub.f32 %v1296, %v1360
      %v1377 = vsub.f32 %v1297, %v1361
      %v1378 = vsub.f32 %v1298, %v1362
      %v1379 = vsub.f32 %v1299, %v1363
      %v1380 = vsub.f32 %v1300, %v1364
      %v1381 = vsub.f32 %v1301, %v1365
      %v1382 = vsub.f32 %v1302, %v1366
      %v1383 = vmul.f32 %v1367, %v1367
      %v1384 = vmul.f32 %v1368, %v1368
      %v1385 = vmul.f32 %v1369, %v1369
      %v1386 = vmul.f32 %v1370, %v1370
      %v1387 = vmul.f32 %v1371, %v1371
      %v1388 = vmul.f32 %v1372, %v1372
      %v1389 = vmul.f32 %v1373, %v1373
      %v1390 = vmul.f32 %v1374, %v1374
      %v1391 = vmul.f32 %v1375, %v1375
      %v1392 = vmul.f32 %v1376, %v1376
      %v1393 = vmul.f32 %v1377, %v1377
      %v1394 = vmul.f32 %v1378, %v1378
      %v1395 = vmul.f32 %v1379, %v1379
      %v1396 = vmul.f32 %v1380, %v1380
      %v1397 = vmul.f32 %v1381, %v1381
      %v1398 = vmul.f32 %v1382, %v1382
      %v1399 = vsel %vm361, %v1383, 0.0
      %1400 = vadd.xlane.f32.xlu0 %v1399
      %v1401 = vpop.xlane.xlu0 %1400
      %v1402 = vsel %vm361, %v1384, 0.0
      %1403 = vadd.xlane.f32.xlu0 %v1402
      %v1404 = vpop.xlane.xlu0 %1403
      %v1405 = vsel %vm361, %v1385, 0.0
      %1406 = vadd.xlane.f32.xlu0 %v1405
      %v1407 = vpop.xlane.xlu0 %1406
      %v1408 = vsel %vm361, %v1386, 0.0
      %1409 = vadd.xlane.f32.xlu0 %v1408
      %v1410 = vpop.xlane.xlu0 %1409
      %v1411 = vsel %vm361, %v1387, 0.0
      %1412 = vadd.xlane.f32.xlu0 %v1411
      %v1413 = vpop.xlane.xlu0 %1412
      %v1414 = vsel %vm361, %v1388, 0.0
      %1415 = vadd.xlane.f32.xlu0 %v1414
      %v1416 = vpop.xlane.xlu0 %1415
      %v1417 = vsel %vm361, %v1389, 0.0
      %1418 = vadd.xlane.f32.xlu0 %v1417
      %v1419 = vpop.xlane.xlu0 %1418
      %v1420 = vsel %vm361, %v1390, 0.0
      %1421 = vadd.xlane.f32.xlu0 %v1420
      %v1422 = vpop.xlane.xlu0 %1421
      %v1423 = vsel %vm361, %v1391, 0.0
      %1424 = vadd.xlane.f32.xlu0 %v1423
      %v1425 = vpop.xlane.xlu0 %1424
      %v1426 = vsel %vm361, %v1392, 0.0
      %1427 = vadd.xlane.f32.xlu0 %v1426
      %v1428 = vpop.xlane.xlu0 %1427
      %v1429 = vsel %vm361, %v1393, 0.0
      %1430 = vadd.xlane.f32.xlu0 %v1429
      %v1431 = vpop.xlane.xlu0 %1430
      %v1432 = vsel %vm361, %v1394, 0.0
      %1433 = vadd.xlane.f32.xlu0 %v1432
      %v1434 = vpop.xlane.xlu0 %1433
      %v1435 = vsel %vm361, %v1395, 0.0
      %1436 = vadd.xlane.f32.xlu0 %v1435
      %v1437 = vpop.xlane.xlu0 %1436
      %v1438 = vsel %vm361, %v1396, 0.0
      %1439 = vadd.xlane.f32.xlu0 %v1438
      %v1440 = vpop.xlane.xlu0 %1439
      %v1441 = vsel %vm361, %v1397, 0.0
      %1442 = vadd.xlane.f32.xlu0 %v1441
      %v1443 = vpop.xlane.xlu0 %1442
      %v1444 = vsel %vm361, %v1398, 0.0
      %1445 = vadd.xlane.f32.xlu0 %v1444
      %v1446 = vpop.xlane.xlu0 %1445
      %v1447 = vmul.f32 %v1401, %v628
      %v1448 = vmul.f32 %v1404, %v628
      %v1449 = vmul.f32 %v1407, %v628
      %v1450 = vmul.f32 %v1410, %v628
      %v1451 = vmul.f32 %v1413, %v628
      %v1452 = vmul.f32 %v1416, %v628
      %v1453 = vmul.f32 %v1419, %v628
      %v1454 = vmul.f32 %v1422, %v628
      %v1455 = vmul.f32 %v1425, %v628
      %v1456 = vmul.f32 %v1428, %v628
      %v1457 = vmul.f32 %v1431, %v628
      %v1458 = vmul.f32 %v1434, %v628
      %v1459 = vmul.f32 %v1437, %v628
      %v1460 = vmul.f32 %v1440, %v628
      %v1461 = vmul.f32 %v1443, %v628
      %v1462 = vmul.f32 %v1446, %v628
      %v1463 = vadd.f32 %v1447, 1e-05
      %v1464 = vadd.f32 %v1448, 1e-05
      %v1465 = vadd.f32 %v1449, 1e-05
      %v1466 = vadd.f32 %v1450, 1e-05
      %v1467 = vadd.f32 %v1451, 1e-05
      %v1468 = vadd.f32 %v1452, 1e-05
      %v1469 = vadd.f32 %v1453, 1e-05
      %v1470 = vadd.f32 %v1454, 1e-05
      %v1471 = vadd.f32 %v1455, 1e-05
      %v1472 = vadd.f32 %v1456, 1e-05
      %v1473 = vadd.f32 %v1457, 1e-05
      %v1474 = vadd.f32 %v1458, 1e-05
      %v1475 = vadd.f32 %v1459, 1e-05
      %v1476 = vadd.f32 %v1460, 1e-05
      %v1477 = vadd.f32 %v1461, 1e-05
      %v1478 = vadd.f32 %v1462, 1e-05
      %v1479 = vrsqrt.pop %v1463
      %v1480 = vrsqrt.pop %v1464
      %v1481 = vrsqrt.pop %v1465
      %v1482 = vrsqrt.pop %v1466
      %v1483 = vrsqrt.pop %v1467
      %v1484 = vrsqrt.pop %v1468
      %v1485 = vrsqrt.pop %v1469
      %v1486 = vrsqrt.pop %v1470
      %v1487 = vrsqrt.pop %v1471
      %v1488 = vrsqrt.pop %v1472
      %v1489 = vrsqrt.pop %v1473
      %v1490 = vrsqrt.pop %v1474
      %v1491 = vrsqrt.pop %v1475
      %v1492 = vrsqrt.pop %v1476
      %v1493 = vrsqrt.pop %v1477
      %v1494 = vrsqrt.pop %v1478
      %v1495 = vmul.f32 %v1367, %v1479
      %v1496 = vmul.f32 %v1368, %v1480
      %v1497 = vmul.f32 %v1369, %v1481
      %v1498 = vmul.f32 %v1370, %v1482
      %v1499 = vmul.f32 %v1371, %v1483
      %v1500 = vmul.f32 %v1372, %v1484
      %v1501 = vmul.f32 %v1373, %v1485
      %v1502 = vmul.f32 %v1374, %v1486
      %v1503 = vmul.f32 %v1375, %v1487
      %v1504 = vmul.f32 %v1376, %v1488
      %v1505 = vmul.f32 %v1377, %v1489
      %v1506 = vmul.f32 %v1378, %v1490
      %v1507 = vmul.f32 %v1379, %v1491
      %v1508 = vmul.f32 %v1380, %v1492
      %v1509 = vmul.f32 %v1381, %v1493
      %v1510 = vmul.f32 %v1382, %v1494
      %v1511 = vlaneseq
      %v1512 = vshrl.u32 %v1511, 7
      %v1513 = vsub.s32 5, %v1512
      %v1514 = vrot.slane %v333, %v1513
      %v1515 = vmul.f32 %v1495, %v1514
      %v1516 = vmul.f32 %v1496, %v1514
      %v1517 = vmul.f32 %v1497, %v1514
      %v1518 = vmul.f32 %v1498, %v1514
      %v1519 = vmul.f32 %v1499, %v1514
      %v1520 = vmul.f32 %v1500, %v1514
      %v1521 = vmul.f32 %v1501, %v1514
      %v1522 = vmul.f32 %v1502, %v1514
      %v1523 = vmul.f32 %v1503, %v1514
      %v1524 = vmul.f32 %v1504, %v1514
      %v1525 = vmul.f32 %v1505, %v1514
      %v1526 = vmul.f32 %v1506, %v1514
      %v1527 = vmul.f32 %v1507, %v1514
      %v1528 = vmul.f32 %v1508, %v1514
      %v1529 = vmul.f32 %v1509, %v1514
      %v1530 = vmul.f32 %v1510, %v1514
      %v1531 = vlaneseq
      %v1532 = vshrl.u32 %v1531, 7
      %v1533 = vsub.s32 6, %v1532
      %v1534 = vrot.slane %v333, %v1533
      %v1535 = vadd.f32 %v1515, %v1534
      %v1536 = vadd.f32 %v1516, %v1534
      %v1537 = vadd.f32 %v1517, %v1534
      %v1538 = vadd.f32 %v1518, %v1534
      %v1539 = vadd.f32 %v1519, %v1534
      %v1540 = vadd.f32 %v1520, %v1534
      %v1541 = vadd.f32 %v1521, %v1534
      %v1542 = vadd.f32 %v1522, %v1534
      %v1543 = vadd.f32 %v1523, %v1534
      %v1544 = vadd.f32 %v1524, %v1534
      %v1545 = vadd.f32 %v1525, %v1534
      %v1546 = vadd.f32 %v1526, %v1534
      %v1547 = vadd.f32 %v1527, %v1534
      %v1548 = vadd.f32 %v1528, %v1534
      %v1549 = vadd.f32 %v1529, %v1534
      %v1550 = vadd.f32 %v1530, %v1534
      %1551 = vst.msk [vmem:[%s331] sm:$0xff] %vm361, %v1535
      %1552 = vst.msk [vmem:[%s331 + $0x8] sm:$0xff] %vm361, %v1536
      %1553 = vst.msk [vmem:[%s331 + $0x10] sm:$0xff] %vm361, %v1537
      %1554 = vst.msk [vmem:[%s331 + $0x18] sm:$0xff] %vm361, %v1538
      %1555 = vst.msk [vmem:[%s331 + $0x20] sm:$0xff] %vm361, %v1539
      %1556 = vst.msk [vmem:[%s331 + $0x28] sm:$0xff] %vm361, %v1540
      %1557 = vst.msk [vmem:[%s331 + $0x30] sm:$0xff] %vm361, %v1541
      %1558 = vst.msk [vmem:[%s331 + $0x38] sm:$0xff] %vm361, %v1542
      %1559 = vst.msk [vmem:[%s331 + $0x40] sm:$0xff] %vm361, %v1543
      %1560 = vst.msk [vmem:[%s331 + $0x48] sm:$0xff] %vm361, %v1544
      %1561 = vst.msk [vmem:[%s331 + $0x50] sm:$0xff] %vm361, %v1545
      %1562 = vst.msk [vmem:[%s331 + $0x58] sm:$0xff] %vm361, %v1546
      %1563 = vst.msk [vmem:[%s331 + $0x60] sm:$0xff] %vm361, %v1547
      %1564 = vst.msk [vmem:[%s331 + $0x68] sm:$0xff] %vm361, %v1548
      %1565 = vst.msk [vmem:[%s331 + $0x70] sm:$0xff] %vm361, %v1549
      %1566 = vst.msk [vmem:[%s331 + $0x78] sm:$0xff] %vm361, %v1550
      %s1567 = smul.u32 2, %s19
      %p1568 = scmp.lt.s32.totalorder %s1567, 3
      %s1569 = scalar_select %p1568, %s1567, 3
      %s1570 = smul.addr %s1569, 8
      %s1571 = smul.addr %s1570, 8
      %s1572 = scalar_lea.vmem %s8, %s1571
      // Predicated region
      $region53: #{tpu_custom_call.1} parent=51 // pred_check
        %p1573 = pneg %p215
      $region54: #{tpu_custom_call.1} parent=51 // pred_check_branch
        %1575 = sbr.rel (%p1573) target = $region56
      $region55: #{tpu_custom_call.1} parent=51 // pred_region
        %s1576 = smul.u32 2, %s19
      $region56: #{tpu_custom_call.1} parent=51 // pred_fallthru
        _
    $region52: #{tpu_custom_call.1} parent=5 // pred_fallthru
      _
    %p1577 = scmp.le.s32.totalorder 2, %s14
    // Predicated region
    $region57: #{tpu_custom_call.1} parent=5 // pred_check
      %p1578 = pneg %p1577
    $region58: #{tpu_custom_call.1} parent=5 // pred_check_branch
      %1580 = sbr.rel (%p1578) target = $region60
    $region59: #{tpu_custom_call.1} parent=5 // pred_region
      %s1581 = ssub.s32 %s14, 2
      // Predicated region
      $region61: #{tpu_custom_call.1} parent=59 // pred_check
        %p1582 = pneg %p221
      $region62: #{tpu_custom_call.1} parent=59 // pred_check_branch
        %1584 = sbr.rel (%p1582) target = $region64
      $region63: #{tpu_custom_call.1} parent=59 // pred_region
        %s1585 = smul.u32 2, %s20
        %p1586 = scmp.lt.s32.totalorder %s1585, 3
        %s1587 = scalar_select %p1586, %s1585, 3
        %s1588 = smul.addr %s1587, 8
        %s1589 = smul.addr %s1588, 8
        %s1590 = scalar_lea.vmem %s8, %s1589
      $region64: #{tpu_custom_call.1} parent=59 // pred_fallthru
        _
    $region60: #{tpu_custom_call.1} parent=5 // pred_fallthru
      _
  $region6: #{tpu_custom_call.1} parent=0 // loop_footer
    %s18 = sadd.s32 1, %s14
  $region7: #{tpu_custom_call.1} parent=0 // loop_footer_branch
    %13 = sbr.rel target = $region3
  $region8: #{tpu_custom_call.1} parent=0 // loop_exit
    _

</llo_original>
